<compile_context>
chip_gen: v6e
topology: v6e:2x2x1
jax: 0.10.0
libtpu: 0.0.40
codegen_flags: <defaults>
</compile_context>

<pallas_src>
import functools

import jax
import jax.numpy as jnp
from jax import lax
from jax.experimental import pallas as pl
from jax.experimental.pallas import tpu as pltpu

IN_FEATURES = 2048
CLASS_NUMBERS = 10      # config.class_numbers (config not given; synthetic choice)
LANE = 128              # TPU lane width — pad class dim up to this


def _round_up(x, m):
    return ((x + m - 1) // m) * m


def _linear_kernel(x_ref, w_ref, b_ref, o_ref, *, precision):
    # x_ref: (TM, K), w_ref: (K, C_pad), b_ref: (1, C_pad), o_ref: (TM, C_pad)
    acc = jnp.dot(x_ref[...], w_ref[...],
                  preferred_element_type=jnp.float32, precision=precision)
    o_ref[...] = (acc + b_ref[...]).astype(o_ref.dtype)


@functools.partial(jax.jit, static_argnames=("exact",))
def classifier_forward(x, w_t, b, *, exact=False):
    """x: (B, 2048), w_t: (2048, C), b: (C,)  ->  (B, C) float32.

    exact=False (default): bf16 activations/weights, f32 accumulation (fast).
    exact=True:            f32 inputs, Precision.HIGHEST (matches nn.Linear).
    """
    B, K = x.shape
    C = w_t.shape[1]
    out_dtype = jnp.float32

    # --- dtype / tiling policy -------------------------------------------
    if exact:
        in_dtype = jnp.float32
        row_mult = 8            # f32: (8, 128) tile
        max_tm = 512            # ~10.5 MiB double-buffered -> fits v5e default
        precision = lax.Precision.HIGHEST
    else:
        in_dtype = jnp.bfloat16
        row_mult = 16           # bf16 packs 2 rows per sublane -> (16, 128)
        max_tm = 1024           # ~10 MiB double-buffered -> fits everywhere
        precision = None

    if x.dtype != in_dtype:
        x = x.astype(in_dtype)
    if w_t.dtype != in_dtype:
        w_t = w_t.astype(in_dtype)

    # --- pad class dim to a full lane width (lane-dense stores, full MXU N) --
    C_pad = _round_up(C, LANE)
    if C_pad != C:
        w_t = jnp.pad(w_t, ((0, 0), (0, C_pad - C)))
        b = jnp.pad(b, (0, C_pad - C))
    b2d = b.astype(jnp.float32).reshape(1, C_pad)

    # --- batch tiling: pad only to the row multiple, ragged last block ------
    B_pad = _round_up(B, row_mult)
    if B_pad != B:
        x = jnp.pad(x, ((0, B_pad - B), (0, 0)))
    # >= 2 grid steps whenever possible so v7x's 2 TensorCores both get work.
    TM = min(max_tm, _round_up(pl.cdiv(B, 2), row_mult))
    grid = (pl.cdiv(B_pad, TM),)

    in_itemsize = 2 if in_dtype == jnp.bfloat16 else 4
    cost = pl.CostEstimate(
        flops=2 * B_pad * K * C_pad,
        bytes_accessed=(B_pad * K * in_itemsize          # x
                        + K * C_pad * in_itemsize        # weight
                        + C_pad * 4                      # bias
                        + B_pad * C_pad * 4),            # output
        transcendentals=0,
    )

    kernel = functools.partial(_linear_kernel, precision=precision)

    out_pad = pl.pallas_call(
        kernel,
        out_shape=jax.ShapeDtypeStruct((B_pad, C_pad), out_dtype),
        grid_spec=pltpu.PrefetchScalarGridSpec(
            num_scalar_prefetch=0,
            grid=grid,
            in_specs=[
                pl.BlockSpec((TM, K), lambda i: (i, 0)),      # streamed x tiles
                pl.BlockSpec((K, C_pad), lambda i: (0, 0)),   # resident weight
                pl.BlockSpec((1, C_pad), lambda i: (0, 0)),   # resident bias
            ],
            out_specs=pl.BlockSpec((TM, C_pad), lambda i: (i, 0)),
        ),
        compiler_params=pltpu.CompilerParams(
            dimension_semantics=("parallel",)),               # batch is independent
        cost_estimate=cost,
    )(x, w_t, b2d)

    # Slice padding away outside the kernel.
    return out_pad[:B, :C]


if __name__ == "__main__":
    key = jax.random.PRNGKey(0)
    kx, kw, kb = jax.random.split(key, 3)

    # B=40 deliberately exercises: ragged last block (40 not a multiple of TM),
    # B padded to the bf16 row multiple (48), and a 2-step parallel grid.
    B = 40
    x = jax.random.normal(kx, (B, IN_FEATURES), dtype=jnp.float32)

    # Deterministic parameter init (mimics nn.Linear uniform(-1/sqrt(fan_in), +)).
    bound = 1.0 / jnp.sqrt(jnp.float32(IN_FEATURES))
    w = jax.random.uniform(kw, (CLASS_NUMBERS, IN_FEATURES),
                           minval=-bound, maxval=bound, dtype=jnp.float32)
    b = jax.random.uniform(kb, (CLASS_NUMBERS,),
                           minval=-bound, maxval=bound, dtype=jnp.float32)
    w_t = w.T   # kernel consumes the pre-transposed (in, out) weight

    ref = jnp.dot(x, w.T, precision=lax.Precision.HIGHEST) + b

    # Default bf16 fast path.
    out = jax.block_until_ready(classifier_forward(x, w_t, b))
    assert out.shape == (B, CLASS_NUMBERS)
    assert out.dtype == jnp.float32
    assert jnp.allclose(out, ref, atol=3e-2, rtol=3e-2)

    # Exact f32 path (matches nn.Linear numerics).
    out_exact = jax.block_until_ready(classifier_forward(x, w_t, b, exact=True))
    assert jnp.allclose(out_exact, ref, atol=1e-4, rtol=1e-4)

    print("KERNEL_OK")
</pallas_src>

<mosaic_0001>
module attributes {stable_mosaic.version = 11 : i64} {
  func.func @_linear_kernel(%arg0: i32, %arg1: memref<32x2048xbf16, #tpu.memory_space<vmem>>, %arg2: memref<2048x128xbf16, #tpu.memory_space<vmem>>, %arg3: memref<1x128xf32, #tpu.memory_space<vmem>>, %arg4: memref<32x128xf32, #tpu.memory_space<vmem>>) attributes {dimension_semantics = [#tpu.dimension_semantics<parallel>], iteration_bounds = array<i64: 2>, scalar_prefetch = 0 : i64, scratch_operands = 0 : i64, tpu.core_type = #tpu.core_type<tc>, window_params = [{transform_indices = @transform_0, window_bounds = array<i64: 32, 2048>}, {pipeline_mode = #tpu.pipeline_mode<synchronous>, transform_indices = @transform_1, window_bounds = array<i64: 2048, 128>}, {pipeline_mode = #tpu.pipeline_mode<synchronous>, transform_indices = @transform_2, window_bounds = array<i64: 1, 128>}, {transform_indices = @transform_3, window_bounds = array<i64: 32, 128>}]} {
    %c0 = arith.constant 0 : index
    %c0_0 = arith.constant 0 : index
    %0 = vector.load %arg1[%c0, %c0_0] : memref<32x2048xbf16, #tpu.memory_space<vmem>>, vector<32x2048xbf16>
    %c0_1 = arith.constant 0 : index
    %c0_2 = arith.constant 0 : index
    %1 = vector.load %arg2[%c0_1, %c0_2] : memref<2048x128xbf16, #tpu.memory_space<vmem>>, vector<2048x128xbf16>
    %cst = arith.constant dense<0.000000e+00> : vector<32x128xf32>
    %2 = tpu.matmul %0, %1, %cst {dimension_numbers = #tpu.dot_dimension_numbers<[1], [0], [0], [1], [0, 0, 1, 1], [], []>} : vector<32x2048xbf16>, vector<2048x128xbf16>, vector<32x128xf32> -> vector<32x128xf32>
    %c0_3 = arith.constant 0 : index
    %c0_4 = arith.constant 0 : index
    %3 = vector.load %arg3[%c0_3, %c0_4] : memref<1x128xf32, #tpu.memory_space<vmem>>, vector<1x128xf32>
    %4 = vector.broadcast %3 : vector<1x128xf32> to vector<32x128xf32>
    %5 = arith.addf %2, %4 : vector<32x128xf32>
    %c0_5 = arith.constant 0 : index
    %c0_6 = arith.constant 0 : index
    %6 = vector.load %arg4[%c0_5, %c0_6] : memref<32x128xf32, #tpu.memory_space<vmem>>, vector<32x128xf32>
    tpu.vector_store %arg4[%c0_5, %c0_6], %5 {strides = array<i32>} : memref<32x128xf32, #tpu.memory_space<vmem>>, vector<32x128xf32>,
    return
  }
  func.func @transform_0(%arg0: i32) -> (i32, i32) {
    %c0_i32 = arith.constant 0 : i32
    %c0_i32_0 = arith.constant 0 : i32
    return %arg0, %c0_i32 : i32, i32
  }
  func.func @transform_1(%arg0: i32) -> (i32, i32) {
    %c0_i32 = arith.constant 0 : i32
    %c0_i32_0 = arith.constant 0 : i32
    %c0_i32_1 = arith.constant 0 : i32
    return %c0_i32, %c0_i32_0 : i32, i32
  }
  func.func @transform_2(%arg0: i32) -> (i32, i32) {
    %c0_i32 = arith.constant 0 : i32
    %c0_i32_0 = arith.constant 0 : i32
    %c0_i32_1 = arith.constant 0 : i32
    return %c0_i32, %c0_i32_0 : i32, i32
  }
  func.func @transform_3(%arg0: i32) -> (i32, i32) {
    %c0_i32 = arith.constant 0 : i32
    %c0_i32_0 = arith.constant 0 : i32
    return %arg0, %c0_i32 : i32, i32
  }
}

</mosaic_0001>

<llo_original>
// kernel: classifier_forward.1
$region0: #{classifier_forward.1}
  #allocation0 [shape = 'u32[]', space=smem, size = 0x4, offset = 0x4, fixed_abs, tag = 'smem constant byte address 0x4 - core index']
  #allocation1 [shape = 'u32[144,128]{1,0:T(1,128)}', space=vmem, size = 0x12000, scoped, tag = 'internal scratch']
  %s0 = inlined_call_operand.vmem [shape: bf16[48,2048], index: 0, kind: input, shape index: {}]
  %s1 = inlined_call_operand.vmem [shape: bf16[2048,128], index: 1, kind: input, shape index: {}]
  %s2 = inlined_call_operand.vmem [shape: f32[1,128], index: 2, kind: input, shape index: {}]
  %s3 = inlined_call_operand.vmem [shape: f32[48,128], index: 3, kind: output, shape index: {}]
  %s4 = sld [smem:[#allocation0]]
  $region93: #{classifier_forward.1} parent=0
    _
  %s6 = ssub.s32 1, %s4
  %s7 = scalar_select 0, %s6, %s4
  $region1: #{classifier_forward.1} parent=0
    #allocation2 [shape = 'u8[32768]{0}', space=vmem, size = 0x8000, scoped, tag = 'output window, operand 0']
    loop: start=0, step=1, limit=4
    $region2: #{classifier_forward.1} parent=1 // loop_pre_header
      _
    $region3: #{classifier_forward.1} parent=1 // loop_header
      %s9 = sphi 0, %s13
      %p10 = scmp.ge.s32.totalorder %s9, 4
      %s19 = sphi 0, %s21
      %s22 = sphi 0, %s19
      %s23 = sphi 0, %s22
      %s39 = sphi 0, %s23
      %s43 = sphi 0, %s43
      %s45 = sphi 0, %s43
      %s46 = sphi 0, %s45
      %s60 = sphi 0, %s46
      %s64 = sphi 0, %s64
      %s66 = sphi 0, %s64
      %s67 = sphi 0, %s66
      %s81 = sphi 0, %s67
      %s87 = sphi 0, %s89
      %s90 = sphi 0, %s87
      %s91 = sphi 0, %s90
      %s107 = sphi 0, %s91
    $region4: #{classifier_forward.1} parent=1 // loop_header_branch
      %12 = sbr.rel (%p10) target = $region8
    $region5: #{classifier_forward.1} parent=1 // loop_body
      %s14 = ssub.s32 %s9, 1
      %s15 = ssub.s32 %s9, 2
      %s16 = sadd.s32 %s9, 1
      %s17 = ssub.s32 %s9, %s16
      %p18 = scmp.eq.s32.totalorder %s17, 0
      %s20 = sadd.s32 %s19, 1
      %s21 = scalar_select %p18, %s19, %s20
      %p24 = pneg %p18
      %p25 = scmp.eq.s32.totalorder %s9, 1
      %p26 = por %p24, %p25
      %p27 = scmp.ne.s32.totalorder %s19, %s22
      %p28 = scmp.eq.s32.totalorder %s9, 0
      %p29 = por %p27, %p28
      %p30 = scmp.ne.s32.totalorder %s19, %s22
      %p31 = scmp.eq.s32.totalorder %s14, 1
      %p32 = por %p30, %p31
      %p33 = scmp.ne.s32.totalorder %s22, %s23
      %p34 = scmp.eq.s32.totalorder %s14, 0
      %p35 = por %p33, %p34
      %p36 = scmp.ne.s32.totalorder %s22, %s23
      %p37 = scmp.eq.s32.totalorder %s15, 1
      %p38 = por %p36, %p37
      %p40 = scmp.ne.s32.totalorder %s23, %s39
      %p41 = scmp.eq.s32.totalorder %s15, 0
      %p42 = por %p40, %p41
      %s44 = sadd.s32 %s43, 1
      %p47 = scmp.eq.s32.totalorder %s9, 1
      %p48 = scmp.ne.s32.totalorder %s43, %s45
      %p49 = scmp.eq.s32.totalorder %s9, 0
      %p50 = por %p48, %p49
      %p51 = scmp.ne.s32.totalorder %s43, %s45
      %p52 = scmp.eq.s32.totalorder %s14, 1
      %p53 = por %p51, %p52
      %p54 = scmp.ne.s32.totalorder %s45, %s46
      %p55 = scmp.eq.s32.totalorder %s14, 0
      %p56 = por %p54, %p55
      %p57 = scmp.ne.s32.totalorder %s45, %s46
      %p58 = scmp.eq.s32.totalorder %s15, 1
      %p59 = por %p57, %p58
      %p61 = scmp.ne.s32.totalorder %s46, %s60
      %p62 = scmp.eq.s32.totalorder %s15, 0
      %p63 = por %p61, %p62
      %s65 = sadd.s32 %s64, 1
      %p68 = scmp.eq.s32.totalorder %s9, 1
      %p69 = scmp.ne.s32.totalorder %s64, %s66
      %p70 = scmp.eq.s32.totalorder %s9, 0
      %p71 = por %p69, %p70
      %p72 = scmp.ne.s32.totalorder %s64, %s66
      %p73 = scmp.eq.s32.totalorder %s14, 1
      %p74 = por %p72, %p73
      %p75 = scmp.ne.s32.totalorder %s66, %s67
      %p76 = scmp.eq.s32.totalorder %s14, 0
      %p77 = por %p75, %p76
      %p78 = scmp.ne.s32.totalorder %s66, %s67
      %p79 = scmp.eq.s32.totalorder %s15, 1
      %p80 = por %p78, %p79
      %p82 = scmp.ne.s32.totalorder %s67, %s81
      %p83 = scmp.eq.s32.totalorder %s15, 0
      %p84 = por %p82, %p83
      %s85 = ssub.s32 %s9, %s16
      %p86 = scmp.eq.s32.totalorder %s85, 0
      %s88 = sadd.s32 %s87, 1
      %s89 = scalar_select %p86, %s87, %s88
      %p92 = pneg %p86
      %p93 = scmp.eq.s32.totalorder %s9, 1
      %p94 = por %p92, %p93
      %p95 = scmp.ne.s32.totalorder %s87, %s90
      %p96 = scmp.eq.s32.totalorder %s9, 0
      %p97 = por %p95, %p96
      %p98 = scmp.ne.s32.totalorder %s87, %s90
      %p99 = scmp.eq.s32.totalorder %s14, 1
      %p100 = por %p98, %p99
      %p101 = scmp.ne.s32.totalorder %s90, %s91
      %p102 = scmp.eq.s32.totalorder %s14, 0
      %p103 = por %p101, %p102
      %p104 = scmp.ne.s32.totalorder %s90, %s91
      %p105 = scmp.eq.s32.totalorder %s15, 1
      %p106 = por %p104, %p105
      %p108 = scmp.ne.s32.totalorder %s91, %s107
      %p109 = scmp.eq.s32.totalorder %s15, 0
      %p110 = por %p108, %p109
      %p111 = scmp.le.s32.totalorder 1, %s9
      %p112 = scmp.lt.s32.totalorder %s9, 3
      %p113 = pnand %p111, %p112
      %p114 = pneg %p113
      // Predicated region
      $region9: #{classifier_forward.1} parent=5 // pred_check
        _
      $region10: #{classifier_forward.1} parent=5 // pred_check_branch
        %116 = sbr.rel (%p113) target = $region12
      $region11: #{classifier_forward.1} parent=5 // pred_region
        %s117 = ssub.s32 %s9, 1
        // Predicated region
        $region13: #{classifier_forward.1} parent=11 // pred_check
          %p118 = pneg %p56
        $region14: #{classifier_forward.1} parent=11 // pred_check_branch
          %120 = sbr.rel (%p118) target = $region16
        $region15: #{classifier_forward.1} parent=11 // pred_region
          _
        $region16: #{classifier_forward.1} parent=11 // pred_fallthru
          _
        // Predicated region
        $region17: #{classifier_forward.1} parent=11 // pred_check
          %p121 = pneg %p77
        $region18: #{classifier_forward.1} parent=11 // pred_check_branch
          %123 = sbr.rel (%p121) target = $region20
        $region19: #{classifier_forward.1} parent=11 // pred_region
          _
        $region20: #{classifier_forward.1} parent=11 // pred_fallthru
          _
      $region12: #{classifier_forward.1} parent=5 // pred_fallthru
        _
      %p124 = scmp.lt.s32.totalorder %s9, 2
      // Predicated region
      $region21: #{classifier_forward.1} parent=5 // pred_check
        %p125 = pneg %p124
      $region22: #{classifier_forward.1} parent=5 // pred_check_branch
        %127 = sbr.rel (%p125) target = $region24
      $region23: #{classifier_forward.1} parent=5 // pred_region
        // Predicated region
        $region25: #{classifier_forward.1} parent=23 // pred_check
          %p128 = pneg %p29
        $region26: #{classifier_forward.1} parent=23 // pred_check_branch
          %130 = sbr.rel (%p128) target = $region28
        $region27: #{classifier_forward.1} parent=23 // pred_region
          %s131 = smul.u32 4, %s9
          %s132 = ssub.s32 6, %s131
          %p133 = scmp.lt.s32.totalorder %s132, 4
          %s134 = scalar_select %p133, %s132, 4
          %s135 = smul.u32 64, %s134
          %s136 = smul.u32 %s135, 16
          %p137 = scmp.lt.s32.totalorder %s131, 5
          %s138 = scalar_select %p137, %s131, 5
          %s139 = smul.addr %s138, 16
          %s140 = smul.addr %s139, 4
          %s141 = scalar_lea.vmem %s0, %s140
          %s142 = smul.u32 4, %s9
          %s143 = ssub.s32 6, %s142
          %p144 = scmp.lt.s32.totalorder %s143, 4
          %s145 = scalar_select %p144, %s143, 4
          %s146 = smul.u32 64, %s145
          %s147 = smul.u32 %s146, 16
        $region28: #{classifier_forward.1} parent=23 // pred_fallthru
          _
      $region24: #{classifier_forward.1} parent=5 // pred_fallthru
        _
      %p148 = scmp.le.s32.totalorder 1, %s9
      %p149 = scmp.lt.s32.totalorder %s9, 3
      %p150 = pnand %p148, %p149
      %p151 = pneg %p150
      // Predicated region
      $region29: #{classifier_forward.1} parent=5 // pred_check
        _
      $region30: #{classifier_forward.1} parent=5 // pred_check_branch
        %153 = sbr.rel (%p150) target = $region32
      $region31: #{classifier_forward.1} parent=5 // pred_region
        %s154 = ssub.s32 %s9, 1
        %s155 = smul.u32 4, %s14
        %s156 = ssub.s32 6, %s155
        %p157 = scmp.lt.s32.totalorder %s156, 4
        %s158 = scalar_select %p157, %s156, 4
        %s159 = smul.u32 64, %s158
        %s160 = smul.u32 %s159, 16
        %p161 = scmp.lt.s32.totalorder %s155, 5
        %s162 = scalar_select %p161, %s155, 5
        %s163 = smul.addr %s162, 16
        %s164 = smul.addr %s163, 4
        %s165 = scalar_lea.vmem %s0, %s164
        %p166 = pneg %p35
        %p167 = pneg %p32
        %p168 = pneg %p56
        %p169 = pneg %p53
        %p170 = pneg %p77
        %p171 = pneg %p74
        %p172 = pneg %p103
        %p173 = pneg %p100
        %s174 = sand.u32 %s90, 1
        %s175 = sand.u32 %s90, 1
        %s176 = smul.addr %s175, 32
        %s177 = scalar_lea.vmem [#allocation2], %s176
        %s178 = smul.u32 4, %s14
        %s179 = ssub.s32 6, %s178
        %p180 = scmp.lt.s32.totalorder %s179, 4
        %s181 = scalar_select %p180, %s179, 4
        %s182 = smul.u32 64, %s181
        %s183 = smul.u32 %s182, 16
        %p184 = scmp.lt.s32.totalorder %s178, 5
        %s185 = scalar_select %p184, %s178, 5
        %s186 = smul.addr %s185, 16
        %s187 = smul.addr %s186, 4
        %s188 = scalar_lea.vmem %s0, %s187
        %s189 = smul.u32 4, %s14
        %s190 = ssub.s32 6, %s189
        %p191 = scmp.lt.s32.totalorder %s190, 4
        %s192 = scalar_select %p191, %s190, 4
        %s193 = smul.u32 64, %s192
        %s194 = smul.u32 %s193, 16
        %s195 = smul.u32 4, %s14
        %s196 = ssub.s32 6, %s195
        %p197 = scmp.lt.s32.totalorder %s196, 4
        %s198 = scalar_select %p197, %s196, 4
        %s199 = smul.u32 128, %s198
        %v201 = vld [vmem:[%s188] sm:$0xff]
        %v202 = vld [vmem:[%s188 + $0x8] sm:$0xff]
        %v203 = vld [vmem:[%s188 + $0x10] sm:$0xff]
        %v204 = vld [vmem:[%s188 + $0x18] sm:$0xff]
        %v205 = vld [vmem:[%s188 + $0x20] sm:$0xff]
        %v206 = vld [vmem:[%s188 + $0x28] sm:$0xff]
        %v207 = vld [vmem:[%s188 + $0x30] sm:$0xff]
        %v208 = vld [vmem:[%s188 + $0x38] sm:$0xff]
        %v209 = vld [vmem:[%s188 + $0x40] sm:$0xff]
        %v210 = vld [vmem:[%s188 + $0x48] sm:$0xff]
        %v211 = vld [vmem:[%s188 + $0x50] sm:$0xff]
        %v212 = vld [vmem:[%s188 + $0x58] sm:$0xff]
        %v213 = vld [vmem:[%s188 + $0x60] sm:$0xff]
        %v214 = vld [vmem:[%s188 + $0x68] sm:$0xff]
        %v215 = vld [vmem:[%s188 + $0x70] sm:$0xff]
        %v216 = vld [vmem:[%s188 + $0x78] sm:$0xff]
        %v217 = vld [vmem:[%s188 + $0x80] sm:$0xff]
        %v218 = vld [vmem:[%s188 + $0x88] sm:$0xff]
        %v219 = vld [vmem:[%s188 + $0x90] sm:$0xff]
        %v220 = vld [vmem:[%s188 + $0x98] sm:$0xff]
        %v221 = vld [vmem:[%s188 + $0xa0] sm:$0xff]
        %v222 = vld [vmem:[%s188 + $0xa8] sm:$0xff]
        %v223 = vld [vmem:[%s188 + $0xb0] sm:$0xff]
        %v224 = vld [vmem:[%s188 + $0xb8] sm:$0xff]
        %v225 = vld [vmem:[%s188 + $0xc0] sm:$0xff]
        %v226 = vld [vmem:[%s188 + $0xc8] sm:$0xff]
        %v227 = vld [vmem:[%s188 + $0xd0] sm:$0xff]
        %v228 = vld [vmem:[%s188 + $0xd8] sm:$0xff]
        %v229 = vld [vmem:[%s188 + $0xe0] sm:$0xff]
        %v230 = vld [vmem:[%s188 + $0xe8] sm:$0xff]
        %v231 = vld [vmem:[%s188 + $0xf0] sm:$0xff]
        %v232 = vld [vmem:[%s188 + $0xf8] sm:$0xff]
        %v233 = vld [vmem:[%s1] sm:$0xf]
        %v234 = vld [vmem:[%s1 + $0x4] sm:$0xf]
        %v235 = vld [vmem:[%s1 + $0x8] sm:$0xf]
        %v236 = vld [vmem:[%s1 + $0xc] sm:$0xf]
        %v237 = vld [vmem:[%s1 + $0x10] sm:$0xf]
        %v238 = vld [vmem:[%s1 + $0x14] sm:$0xf]
        %v239 = vld [vmem:[%s1 + $0x18] sm:$0xf]
        %v240 = vld [vmem:[%s1 + $0x1c] sm:$0xf]
        %v241 = vld [vmem:[%s1 + $0x20] sm:$0xf]
        %v242 = vld [vmem:[%s1 + $0x24] sm:$0xf]
        %v243 = vld [vmem:[%s1 + $0x28] sm:$0xf]
        %v244 = vld [vmem:[%s1 + $0x2c] sm:$0xf]
        %v245 = vld [vmem:[%s1 + $0x30] sm:$0xf]
        %v246 = vld [vmem:[%s1 + $0x34] sm:$0xf]
        %v247 = vld [vmem:[%s1 + $0x38] sm:$0xf]
        %v248 = vld [vmem:[%s1 + $0x3c] sm:$0xf]
        %v249 = vld [vmem:[%s1 + $0x40] sm:$0xf]
        %v250 = vld [vmem:[%s1 + $0x44] sm:$0xf]
        %v251 = vld [vmem:[%s1 + $0x48] sm:$0xf]
        %v252 = vld [vmem:[%s1 + $0x4c] sm:$0xf]
        %v253 = vld [vmem:[%s1 + $0x50] sm:$0xf]
        %v254 = vld [vmem:[%s1 + $0x54] sm:$0xf]
        %v255 = vld [vmem:[%s1 + $0x58] sm:$0xf]
        %v256 = vld [vmem:[%s1 + $0x5c] sm:$0xf]
        %v257 = vld [vmem:[%s1 + $0x60] sm:$0xf]
        %v258 = vld [vmem:[%s1 + $0x64] sm:$0xf]
        %v259 = vld [vmem:[%s1 + $0x68] sm:$0xf]
        %v260 = vld [vmem:[%s1 + $0x6c] sm:$0xf]
        %v261 = vld [vmem:[%s1 + $0x70] sm:$0xf]
        %v262 = vld [vmem:[%s1 + $0x74] sm:$0xf]
        %v263 = vld [vmem:[%s1 + $0x78] sm:$0xf]
        %v264 = vld [vmem:[%s1 + $0x7c] sm:$0xf]
        %v265 = vld [vmem:[%s1 + $0x80] sm:$0xf]
        %v266 = vld [vmem:[%s1 + $0x84] sm:$0xf]
        %v267 = vld [vmem:[%s1 + $0x88] sm:$0xf]
        %v268 = vld [vmem:[%s1 + $0x8c] sm:$0xf]
        %v269 = vld [vmem:[%s1 + $0x90] sm:$0xf]
        %v270 = vld [vmem:[%s1 + $0x94] sm:$0xf]
        %v271 = vld [vmem:[%s1 + $0x98] sm:$0xf]
        %v272 = vld [vmem:[%s1 + $0x9c] sm:$0xf]
        %v273 = vld [vmem:[%s1 + $0xa0] sm:$0xf]
        %v274 = vld [vmem:[%s1 + $0xa4] sm:$0xf]
        %v275 = vld [vmem:[%s1 + $0xa8] sm:$0xf]
        %v276 = vld [vmem:[%s1 + $0xac] sm:$0xf]
        %v277 = vld [vmem:[%s1 + $0xb0] sm:$0xf]
        %v278 = vld [vmem:[%s1 + $0xb4] sm:$0xf]
        %v279 = vld [vmem:[%s1 + $0xb8] sm:$0xf]
        %v280 = vld [vmem:[%s1 + $0xbc] sm:$0xf]
        %v281 = vld [vmem:[%s1 + $0xc0] sm:$0xf]
        %v282 = vld [vmem:[%s1 + $0xc4] sm:$0xf]
        %v283 = vld [vmem:[%s1 + $0xc8] sm:$0xf]
        %v284 = vld [vmem:[%s1 + $0xcc] sm:$0xf]
        %v285 = vld [vmem:[%s1 + $0xd0] sm:$0xf]
        %v286 = vld [vmem:[%s1 + $0xd4] sm:$0xf]
        %v287 = vld [vmem:[%s1 + $0xd8] sm:$0xf]
        %v288 = vld [vmem:[%s1 + $0xdc] sm:$0xf]
        %v289 = vld [vmem:[%s1 + $0xe0] sm:$0xf]
        %v290 = vld [vmem:[%s1 + $0xe4] sm:$0xf]
        %v291 = vld [vmem:[%s1 + $0xe8] sm:$0xf]
        %v292 = vld [vmem:[%s1 + $0xec] sm:$0xf]
        %v293 = vld [vmem:[%s1 + $0xf0] sm:$0xf]
        %v294 = vld [vmem:[%s1 + $0xf4] sm:$0xf]
        %v295 = vld [vmem:[%s1 + $0xf8] sm:$0xf]
        %v296 = vld [vmem:[%s1 + $0xfc] sm:$0xf]
        %v297 = vld [vmem:[%s1 + $0x100] sm:$0xf]
        %v298 = vld [vmem:[%s1 + $0x104] sm:$0xf]
        %v299 = vld [vmem:[%s1 + $0x108] sm:$0xf]
        %v300 = vld [vmem:[%s1 + $0x10c] sm:$0xf]
        %v301 = vld [vmem:[%s1 + $0x110] sm:$0xf]
        %v302 = vld [vmem:[%s1 + $0x114] sm:$0xf]
        %v303 = vld [vmem:[%s1 + $0x118] sm:$0xf]
        %v304 = vld [vmem:[%s1 + $0x11c] sm:$0xf]
        %v305 = vld [vmem:[%s1 + $0x120] sm:$0xf]
        %v306 = vld [vmem:[%s1 + $0x124] sm:$0xf]
        %v307 = vld [vmem:[%s1 + $0x128] sm:$0xf]
        %v308 = vld [vmem:[%s1 + $0x12c] sm:$0xf]
        %v309 = vld [vmem:[%s1 + $0x130] sm:$0xf]
        %v310 = vld [vmem:[%s1 + $0x134] sm:$0xf]
        %v311 = vld [vmem:[%s1 + $0x138] sm:$0xf]
        %v312 = vld [vmem:[%s1 + $0x13c] sm:$0xf]
        %v313 = vld [vmem:[%s1 + $0x140] sm:$0xf]
        %v314 = vld [vmem:[%s1 + $0x144] sm:$0xf]
        %v315 = vld [vmem:[%s1 + $0x148] sm:$0xf]
        %v316 = vld [vmem:[%s1 + $0x14c] sm:$0xf]
        %v317 = vld [vmem:[%s1 + $0x150] sm:$0xf]
        %v318 = vld [vmem:[%s1 + $0x154] sm:$0xf]
        %v319 = vld [vmem:[%s1 + $0x158] sm:$0xf]
        %v320 = vld [vmem:[%s1 + $0x15c] sm:$0xf]
        %v321 = vld [vmem:[%s1 + $0x160] sm:$0xf]
        %v322 = vld [vmem:[%s1 + $0x164] sm:$0xf]
        %v323 = vld [vmem:[%s1 + $0x168] sm:$0xf]
        %v324 = vld [vmem:[%s1 + $0x16c] sm:$0xf]
        %v325 = vld [vmem:[%s1 + $0x170] sm:$0xf]
        %v326 = vld [vmem:[%s1 + $0x174] sm:$0xf]
        %v327 = vld [vmem:[%s1 + $0x178] sm:$0xf]
        %v328 = vld [vmem:[%s1 + $0x17c] sm:$0xf]
        %v329 = vld [vmem:[%s1 + $0x180] sm:$0xf]
        %v330 = vld [vmem:[%s1 + $0x184] sm:$0xf]
        %v331 = vld [vmem:[%s1 + $0x188] sm:$0xf]
        %v332 = vld [vmem:[%s1 + $0x18c] sm:$0xf]
        %v333 = vld [vmem:[%s1 + $0x190] sm:$0xf]
        %v334 = vld [vmem:[%s1 + $0x194] sm:$0xf]
        %v335 = vld [vmem:[%s1 + $0x198] sm:$0xf]
        %v336 = vld [vmem:[%s1 + $0x19c] sm:$0xf]
        %v337 = vld [vmem:[%s1 + $0x1a0] sm:$0xf]
        %v338 = vld [vmem:[%s1 + $0x1a4] sm:$0xf]
        %v339 = vld [vmem:[%s1 + $0x1a8] sm:$0xf]
        %v340 = vld [vmem:[%s1 + $0x1ac] sm:$0xf]
        %v341 = vld [vmem:[%s1 + $0x1b0] sm:$0xf]
        %v342 = vld [vmem:[%s1 + $0x1b4] sm:$0xf]
        %v343 = vld [vmem:[%s1 + $0x1b8] sm:$0xf]
        %v344 = vld [vmem:[%s1 + $0x1bc] sm:$0xf]
        %v345 = vld [vmem:[%s1 + $0x1c0] sm:$0xf]
        %v346 = vld [vmem:[%s1 + $0x1c4] sm:$0xf]
        %v347 = vld [vmem:[%s1 + $0x1c8] sm:$0xf]
        %v348 = vld [vmem:[%s1 + $0x1cc] sm:$0xf]
        %v349 = vld [vmem:[%s1 + $0x1d0] sm:$0xf]
        %v350 = vld [vmem:[%s1 + $0x1d4] sm:$0xf]
        %v351 = vld [vmem:[%s1 + $0x1d8] sm:$0xf]
        %v352 = vld [vmem:[%s1 + $0x1dc] sm:$0xf]
        %v353 = vld [vmem:[%s1 + $0x1e0] sm:$0xf]
        %v354 = vld [vmem:[%s1 + $0x1e4] sm:$0xf]
        %v355 = vld [vmem:[%s1 + $0x1e8] sm:$0xf]
        %v356 = vld [vmem:[%s1 + $0x1ec] sm:$0xf]
        %v357 = vld [vmem:[%s1 + $0x1f0] sm:$0xf]
        %v358 = vld [vmem:[%s1 + $0x1f4] sm:$0xf]
        %v359 = vld [vmem:[%s1 + $0x1f8] sm:$0xf]
        %v360 = vld [vmem:[%s1 + $0x1fc] sm:$0xf]
        %v361 = vld [vmem:[%s1 + $0x200] sm:$0xf]
        %v362 = vld [vmem:[%s1 + $0x204] sm:$0xf]
        %v363 = vld [vmem:[%s1 + $0x208] sm:$0xf]
        %v364 = vld [vmem:[%s1 + $0x20c] sm:$0xf]
        %v365 = vld [vmem:[%s1 + $0x210] sm:$0xf]
        %v366 = vld [vmem:[%s1 + $0x214] sm:$0xf]
        %v367 = vld [vmem:[%s1 + $0x218] sm:$0xf]
        %v368 = vld [vmem:[%s1 + $0x21c] sm:$0xf]
        %v369 = vld [vmem:[%s1 + $0x220] sm:$0xf]
        %v370 = vld [vmem:[%s1 + $0x224] sm:$0xf]
        %v371 = vld [vmem:[%s1 + $0x228] sm:$0xf]
        %v372 = vld [vmem:[%s1 + $0x22c] sm:$0xf]
        %v373 = vld [vmem:[%s1 + $0x230] sm:$0xf]
        %v374 = vld [vmem:[%s1 + $0x234] sm:$0xf]
        %v375 = vld [vmem:[%s1 + $0x238] sm:$0xf]
        %v376 = vld [vmem:[%s1 + $0x23c] sm:$0xf]
        %v377 = vld [vmem:[%s1 + $0x240] sm:$0xf]
        %v378 = vld [vmem:[%s1 + $0x244] sm:$0xf]
        %v379 = vld [vmem:[%s1 + $0x248] sm:$0xf]
        %v380 = vld [vmem:[%s1 + $0x24c] sm:$0xf]
        %v381 = vld [vmem:[%s1 + $0x250] sm:$0xf]
        %v382 = vld [vmem:[%s1 + $0x254] sm:$0xf]
        %v383 = vld [vmem:[%s1 + $0x258] sm:$0xf]
        %v384 = vld [vmem:[%s1 + $0x25c] sm:$0xf]
        %v385 = vld [vmem:[%s1 + $0x260] sm:$0xf]
        %v386 = vld [vmem:[%s1 + $0x264] sm:$0xf]
        %v387 = vld [vmem:[%s1 + $0x268] sm:$0xf]
        %v388 = vld [vmem:[%s1 + $0x26c] sm:$0xf]
        %v389 = vld [vmem:[%s1 + $0x270] sm:$0xf]
        %v390 = vld [vmem:[%s1 + $0x274] sm:$0xf]
        %v391 = vld [vmem:[%s1 + $0x278] sm:$0xf]
        %v392 = vld [vmem:[%s1 + $0x27c] sm:$0xf]
        %v393 = vld [vmem:[%s1 + $0x280] sm:$0xf]
        %v394 = vld [vmem:[%s1 + $0x284] sm:$0xf]
        %v395 = vld [vmem:[%s1 + $0x288] sm:$0xf]
        %v396 = vld [vmem:[%s1 + $0x28c] sm:$0xf]
        %v397 = vld [vmem:[%s1 + $0x290] sm:$0xf]
        %v398 = vld [vmem:[%s1 + $0x294] sm:$0xf]
        %v399 = vld [vmem:[%s1 + $0x298] sm:$0xf]
        %v400 = vld [vmem:[%s1 + $0x29c] sm:$0xf]
        %v401 = vld [vmem:[%s1 + $0x2a0] sm:$0xf]
        %v402 = vld [vmem:[%s1 + $0x2a4] sm:$0xf]
        %v403 = vld [vmem:[%s1 + $0x2a8] sm:$0xf]
        %v404 = vld [vmem:[%s1 + $0x2ac] sm:$0xf]
        %v405 = vld [vmem:[%s1 + $0x2b0] sm:$0xf]
        %v406 = vld [vmem:[%s1 + $0x2b4] sm:$0xf]
        %v407 = vld [vmem:[%s1 + $0x2b8] sm:$0xf]
        %v408 = vld [vmem:[%s1 + $0x2bc] sm:$0xf]
        %v409 = vld [vmem:[%s1 + $0x2c0] sm:$0xf]
        %v410 = vld [vmem:[%s1 + $0x2c4] sm:$0xf]
        %v411 = vld [vmem:[%s1 + $0x2c8] sm:$0xf]
        %v412 = vld [vmem:[%s1 + $0x2cc] sm:$0xf]
        %v413 = vld [vmem:[%s1 + $0x2d0] sm:$0xf]
        %v414 = vld [vmem:[%s1 + $0x2d4] sm:$0xf]
        %v415 = vld [vmem:[%s1 + $0x2d8] sm:$0xf]
        %v416 = vld [vmem:[%s1 + $0x2dc] sm:$0xf]
        %v417 = vld [vmem:[%s1 + $0x2e0] sm:$0xf]
        %v418 = vld [vmem:[%s1 + $0x2e4] sm:$0xf]
        %v419 = vld [vmem:[%s1 + $0x2e8] sm:$0xf]
        %v420 = vld [vmem:[%s1 + $0x2ec] sm:$0xf]
        %v421 = vld [vmem:[%s1 + $0x2f0] sm:$0xf]
        %v422 = vld [vmem:[%s1 + $0x2f4] sm:$0xf]
        %v423 = vld [vmem:[%s1 + $0x2f8] sm:$0xf]
        %v424 = vld [vmem:[%s1 + $0x2fc] sm:$0xf]
        %v425 = vld [vmem:[%s1 + $0x300] sm:$0xf]
        %v426 = vld [vmem:[%s1 + $0x304] sm:$0xf]
        %v427 = vld [vmem:[%s1 + $0x308] sm:$0xf]
        %v428 = vld [vmem:[%s1 + $0x30c] sm:$0xf]
        %v429 = vld [vmem:[%s1 + $0x310] sm:$0xf]
        %v430 = vld [vmem:[%s1 + $0x314] sm:$0xf]
        %v431 = vld [vmem:[%s1 + $0x318] sm:$0xf]
        %v432 = vld [vmem:[%s1 + $0x31c] sm:$0xf]
        %v433 = vld [vmem:[%s1 + $0x320] sm:$0xf]
        %v434 = vld [vmem:[%s1 + $0x324] sm:$0xf]
        %v435 = vld [vmem:[%s1 + $0x328] sm:$0xf]
        %v436 = vld [vmem:[%s1 + $0x32c] sm:$0xf]
        %v437 = vld [vmem:[%s1 + $0x330] sm:$0xf]
        %v438 = vld [vmem:[%s1 + $0x334] sm:$0xf]
        %v439 = vld [vmem:[%s1 + $0x338] sm:$0xf]
        %v440 = vld [vmem:[%s1 + $0x33c] sm:$0xf]
        %v441 = vld [vmem:[%s1 + $0x340] sm:$0xf]
        %v442 = vld [vmem:[%s1 + $0x344] sm:$0xf]
        %v443 = vld [vmem:[%s1 + $0x348] sm:$0xf]
        %v444 = vld [vmem:[%s1 + $0x34c] sm:$0xf]
        %v445 = vld [vmem:[%s1 + $0x350] sm:$0xf]
        %v446 = vld [vmem:[%s1 + $0x354] sm:$0xf]
        %v447 = vld [vmem:[%s1 + $0x358] sm:$0xf]
        %v448 = vld [vmem:[%s1 + $0x35c] sm:$0xf]
        %v449 = vld [vmem:[%s1 + $0x360] sm:$0xf]
        %v450 = vld [vmem:[%s1 + $0x364] sm:$0xf]
        %v451 = vld [vmem:[%s1 + $0x368] sm:$0xf]
        %v452 = vld [vmem:[%s1 + $0x36c] sm:$0xf]
        %v453 = vld [vmem:[%s1 + $0x370] sm:$0xf]
        %v454 = vld [vmem:[%s1 + $0x374] sm:$0xf]
        %v455 = vld [vmem:[%s1 + $0x378] sm:$0xf]
        %v456 = vld [vmem:[%s1 + $0x37c] sm:$0xf]
        %v457 = vld [vmem:[%s1 + $0x380] sm:$0xf]
        %v458 = vld [vmem:[%s1 + $0x384] sm:$0xf]
        %v459 = vld [vmem:[%s1 + $0x388] sm:$0xf]
        %v460 = vld [vmem:[%s1 + $0x38c] sm:$0xf]
        %v461 = vld [vmem:[%s1 + $0x390] sm:$0xf]
        %v462 = vld [vmem:[%s1 + $0x394] sm:$0xf]
        %v463 = vld [vmem:[%s1 + $0x398] sm:$0xf]
        %v464 = vld [vmem:[%s1 + $0x39c] sm:$0xf]
        %v465 = vld [vmem:[%s1 + $0x3a0] sm:$0xf]
        %v466 = vld [vmem:[%s1 + $0x3a4] sm:$0xf]
        %v467 = vld [vmem:[%s1 + $0x3a8] sm:$0xf]
        %v468 = vld [vmem:[%s1 + $0x3ac] sm:$0xf]
        %v469 = vld [vmem:[%s1 + $0x3b0] sm:$0xf]
        %v470 = vld [vmem:[%s1 + $0x3b4] sm:$0xf]
        %v471 = vld [vmem:[%s1 + $0x3b8] sm:$0xf]
        %v472 = vld [vmem:[%s1 + $0x3bc] sm:$0xf]
        %v473 = vld [vmem:[%s1 + $0x3c0] sm:$0xf]
        %v474 = vld [vmem:[%s1 + $0x3c4] sm:$0xf]
        %v475 = vld [vmem:[%s1 + $0x3c8] sm:$0xf]
        %v476 = vld [vmem:[%s1 + $0x3cc] sm:$0xf]
        %v477 = vld [vmem:[%s1 + $0x3d0] sm:$0xf]
        %v478 = vld [vmem:[%s1 + $0x3d4] sm:$0xf]
        %v479 = vld [vmem:[%s1 + $0x3d8] sm:$0xf]
        %v480 = vld [vmem:[%s1 + $0x3dc] sm:$0xf]
        %v481 = vld [vmem:[%s1 + $0x3e0] sm:$0xf]
        %v482 = vld [vmem:[%s1 + $0x3e4] sm:$0xf]
        %v483 = vld [vmem:[%s1 + $0x3e8] sm:$0xf]
        %v484 = vld [vmem:[%s1 + $0x3ec] sm:$0xf]
        %v485 = vld [vmem:[%s1 + $0x3f0] sm:$0xf]
        %v486 = vld [vmem:[%s1 + $0x3f4] sm:$0xf]
        %v487 = vld [vmem:[%s1 + $0x3f8] sm:$0xf]
        %v488 = vld [vmem:[%s1 + $0x3fc] sm:$0xf]
        %v489 = vld [vmem:[%s2] sm:$0x1]
        %v491 = vlaneseq
        %v492 = vshrl.u32 %v491, 7
        %v493 = vsub.s32 0, %v492
        %v494 = vrot.slane %v489, %v493
        %v528 = vunpack.c.l.b16 %v201
        %v529 = vunpack.c.h.b16 %v201
        %v530 = vunpack.c.l.b16 %v202
        %v531 = vunpack.c.h.b16 %v202
        %v532 = vunpack.c.l.b16 %v203
        %v533 = vunpack.c.h.b16 %v203
        %v534 = vunpack.c.l.b16 %v204
        %v535 = vunpack.c.h.b16 %v204
        %v536 = vunpack.c.l.b16 %v205
        %v537 = vunpack.c.h.b16 %v205
        %v538 = vunpack.c.l.b16 %v206
        %v539 = vunpack.c.h.b16 %v206
        %v540 = vunpack.c.l.b16 %v207
        %v541 = vunpack.c.h.b16 %v207
        %v542 = vunpack.c.l.b16 %v208
        %v543 = vunpack.c.h.b16 %v208
        %v544 = vunpack.c.l.b16 %v209
        %v545 = vunpack.c.h.b16 %v209
        %v546 = vunpack.c.l.b16 %v210
        %v547 = vunpack.c.h.b16 %v210
        %v548 = vunpack.c.l.b16 %v211
        %v549 = vunpack.c.h.b16 %v211
        %v550 = vunpack.c.l.b16 %v212
        %v551 = vunpack.c.h.b16 %v212
        %v552 = vunpack.c.l.b16 %v213
        %v553 = vunpack.c.h.b16 %v213
        %v554 = vunpack.c.l.b16 %v214
        %v555 = vunpack.c.h.b16 %v214
        %v556 = vunpack.c.l.b16 %v215
        %v557 = vunpack.c.h.b16 %v215
        %v558 = vunpack.c.l.b16 %v216
        %v559 = vunpack.c.h.b16 %v216
        %v560 = vunpack.c.l.b16 %v217
        %v561 = vunpack.c.h.b16 %v217
        %v562 = vunpack.c.l.b16 %v218
        %v563 = vunpack.c.h.b16 %v218
        %v564 = vunpack.c.l.b16 %v219
        %v565 = vunpack.c.h.b16 %v219
        %v566 = vunpack.c.l.b16 %v220
        %v567 = vunpack.c.h.b16 %v220
        %v568 = vunpack.c.l.b16 %v221
        %v569 = vunpack.c.h.b16 %v221
        %v570 = vunpack.c.l.b16 %v222
        %v571 = vunpack.c.h.b16 %v222
        %v572 = vunpack.c.l.b16 %v223
        %v573 = vunpack.c.h.b16 %v223
        %v574 = vunpack.c.l.b16 %v224
        %v575 = vunpack.c.h.b16 %v224
        %v576 = vunpack.c.l.b16 %v225
        %v577 = vunpack.c.h.b16 %v225
        %v578 = vunpack.c.l.b16 %v226
        %v579 = vunpack.c.h.b16 %v226
        %v580 = vunpack.c.l.b16 %v227
        %v581 = vunpack.c.h.b16 %v227
        %v582 = vunpack.c.l.b16 %v228
        %v583 = vunpack.c.h.b16 %v228
        %v584 = vunpack.c.l.b16 %v229
        %v585 = vunpack.c.h.b16 %v229
        %v586 = vunpack.c.l.b16 %v230
        %v587 = vunpack.c.h.b16 %v230
        %v588 = vunpack.c.l.b16 %v231
        %v589 = vunpack.c.h.b16 %v231
        %v590 = vunpack.c.l.b16 %v232
        %v591 = vunpack.c.h.b16 %v232
        %v592 = vpack.c.b16 %v544, %v528
        %v593 = vpack.c.b16 %v545, %v529
        %v594 = vpack.c.b16 %v546, %v530
        %v595 = vpack.c.b16 %v547, %v531
        %v596 = vpack.c.b16 %v548, %v532
        %v597 = vpack.c.b16 %v549, %v533
        %v598 = vpack.c.b16 %v550, %v534
        %v599 = vpack.c.b16 %v551, %v535
        %v600 = vpack.c.b16 %v552, %v536
        %v601 = vpack.c.b16 %v553, %v537
        %v602 = vpack.c.b16 %v554, %v538
        %v603 = vpack.c.b16 %v555, %v539
        %v604 = vpack.c.b16 %v556, %v540
        %v605 = vpack.c.b16 %v557, %v541
        %v606 = vpack.c.b16 %v558, %v542
        %v607 = vpack.c.b16 %v559, %v543
        %v608 = vpack.c.b16 %v576, %v560
        %v609 = vpack.c.b16 %v577, %v561
        %v610 = vpack.c.b16 %v578, %v562
        %v611 = vpack.c.b16 %v579, %v563
        %v612 = vpack.c.b16 %v580, %v564
        %v613 = vpack.c.b16 %v581, %v565
        %v614 = vpack.c.b16 %v582, %v566
        %v615 = vpack.c.b16 %v583, %v567
        %v616 = vpack.c.b16 %v584, %v568
        %v617 = vpack.c.b16 %v585, %v569
        %v618 = vpack.c.b16 %v586, %v570
        %v619 = vpack.c.b16 %v587, %v571
        %v620 = vpack.c.b16 %v588, %v572
        %v621 = vpack.c.b16 %v589, %v573
        %v622 = vpack.c.b16 %v590, %v574
        %v623 = vpack.c.b16 %v591, %v575
        %v912 = vunpack.c.l.b16 %v233
        %v913 = vunpack.c.l.b16 %v234
        %v914 = vunpack.c.l.b16 %v235
        %v915 = vunpack.c.l.b16 %v236
        %v916 = vunpack.c.l.b16 %v237
        %v917 = vunpack.c.l.b16 %v238
        %v918 = vunpack.c.l.b16 %v239
        %v919 = vunpack.c.l.b16 %v240
        %v920 = vunpack.c.l.b16 %v241
        %v921 = vunpack.c.l.b16 %v242
        %v922 = vunpack.c.l.b16 %v243
        %v923 = vunpack.c.l.b16 %v244
        %v924 = vunpack.c.l.b16 %v245
        %v925 = vunpack.c.l.b16 %v246
        %v926 = vunpack.c.l.b16 %v247
        %v927 = vunpack.c.l.b16 %v248
        %v928 = vunpack.c.l.b16 %v249
        %v929 = vunpack.c.l.b16 %v250
        %v930 = vunpack.c.l.b16 %v251
        %v931 = vunpack.c.l.b16 %v252
        %v932 = vunpack.c.l.b16 %v253
        %v933 = vunpack.c.l.b16 %v254
        %v934 = vunpack.c.l.b16 %v255
        %v935 = vunpack.c.l.b16 %v256
        %v936 = vunpack.c.l.b16 %v257
        %v937 = vunpack.c.l.b16 %v258
        %v938 = vunpack.c.l.b16 %v259
        %v939 = vunpack.c.l.b16 %v260
        %v940 = vunpack.c.l.b16 %v261
        %v941 = vunpack.c.l.b16 %v262
        %v942 = vunpack.c.l.b16 %v263
        %v943 = vunpack.c.l.b16 %v264
        %v944 = vunpack.c.l.b16 %v265
        %v945 = vunpack.c.l.b16 %v266
        %v946 = vunpack.c.l.b16 %v267
        %v947 = vunpack.c.l.b16 %v268
        %v948 = vunpack.c.l.b16 %v269
        %v949 = vunpack.c.l.b16 %v270
        %v950 = vunpack.c.l.b16 %v271
        %v951 = vunpack.c.l.b16 %v272
        %v952 = vunpack.c.l.b16 %v273
        %v953 = vunpack.c.l.b16 %v274
        %v954 = vunpack.c.l.b16 %v275
        %v955 = vunpack.c.l.b16 %v276
        %v956 = vunpack.c.l.b16 %v277
        %v957 = vunpack.c.l.b16 %v278
        %v958 = vunpack.c.l.b16 %v279
        %v959 = vunpack.c.l.b16 %v280
        %v960 = vunpack.c.l.b16 %v281
        %v961 = vunpack.c.l.b16 %v282
        %v962 = vunpack.c.l.b16 %v283
        %v963 = vunpack.c.l.b16 %v284
        %v964 = vunpack.c.l.b16 %v285
        %v965 = vunpack.c.l.b16 %v286
        %v966 = vunpack.c.l.b16 %v287
        %v967 = vunpack.c.l.b16 %v288
        %v968 = vunpack.c.l.b16 %v289
        %v969 = vunpack.c.l.b16 %v290
        %v970 = vunpack.c.l.b16 %v291
        %v971 = vunpack.c.l.b16 %v292
        %v972 = vunpack.c.l.b16 %v293
        %v973 = vunpack.c.l.b16 %v294
        %v974 = vunpack.c.l.b16 %v295
        %v975 = vunpack.c.l.b16 %v296
        %v976 = vunpack.c.l.b16 %v297
        %v977 = vunpack.c.l.b16 %v298
        %v978 = vunpack.c.l.b16 %v299
        %v979 = vunpack.c.l.b16 %v300
        %v980 = vunpack.c.l.b16 %v301
        %v981 = vunpack.c.l.b16 %v302
        %v982 = vunpack.c.l.b16 %v303
        %v983 = vunpack.c.l.b16 %v304
        %v984 = vunpack.c.l.b16 %v305
        %v985 = vunpack.c.l.b16 %v306
        %v986 = vunpack.c.l.b16 %v307
        %v987 = vunpack.c.l.b16 %v308
        %v988 = vunpack.c.l.b16 %v309
        %v989 = vunpack.c.l.b16 %v310
        %v990 = vunpack.c.l.b16 %v311
        %v991 = vunpack.c.l.b16 %v312
        %v992 = vunpack.c.l.b16 %v313
        %v993 = vunpack.c.l.b16 %v314
        %v994 = vunpack.c.l.b16 %v315
        %v995 = vunpack.c.l.b16 %v316
        %v996 = vunpack.c.l.b16 %v317
        %v997 = vunpack.c.l.b16 %v318
        %v998 = vunpack.c.l.b16 %v319
        %v999 = vunpack.c.l.b16 %v320
        %v1000 = vunpack.c.l.b16 %v321
        %v1001 = vunpack.c.l.b16 %v322
        %v1002 = vunpack.c.l.b16 %v323
        %v1003 = vunpack.c.l.b16 %v324
        %v1004 = vunpack.c.l.b16 %v325
        %v1005 = vunpack.c.l.b16 %v326
        %v1006 = vunpack.c.l.b16 %v327
        %v1007 = vunpack.c.l.b16 %v328
        %v1008 = vunpack.c.l.b16 %v329
        %v1009 = vunpack.c.l.b16 %v330
        %v1010 = vunpack.c.l.b16 %v331
        %v1011 = vunpack.c.l.b16 %v332
        %v1012 = vunpack.c.l.b16 %v333
        %v1013 = vunpack.c.l.b16 %v334
        %v1014 = vunpack.c.l.b16 %v335
        %v1015 = vunpack.c.l.b16 %v336
        %v1016 = vunpack.c.l.b16 %v337
        %v1017 = vunpack.c.l.b16 %v338
        %v1018 = vunpack.c.l.b16 %v339
        %v1019 = vunpack.c.l.b16 %v340
        %v1020 = vunpack.c.l.b16 %v341
        %v1021 = vunpack.c.l.b16 %v342
        %v1022 = vunpack.c.l.b16 %v343
        %v1023 = vunpack.c.l.b16 %v344
        %v1024 = vunpack.c.l.b16 %v345
        %v1025 = vunpack.c.l.b16 %v346
        %v1026 = vunpack.c.l.b16 %v347
        %v1027 = vunpack.c.l.b16 %v348
        %v1028 = vunpack.c.l.b16 %v349
        %v1029 = vunpack.c.l.b16 %v350
        %v1030 = vunpack.c.l.b16 %v351
        %v1031 = vunpack.c.l.b16 %v352
        %v1032 = vunpack.c.l.b16 %v353
        %v1033 = vunpack.c.l.b16 %v354
        %v1034 = vunpack.c.l.b16 %v355
        %v1035 = vunpack.c.l.b16 %v356
        %v1036 = vunpack.c.l.b16 %v357
        %v1037 = vunpack.c.l.b16 %v358
        %v1038 = vunpack.c.l.b16 %v359
        %v1039 = vunpack.c.l.b16 %v360
        %v1040 = vunpack.c.l.b16 %v361
        %v1041 = vunpack.c.l.b16 %v362
        %v1042 = vunpack.c.l.b16 %v363
        %v1043 = vunpack.c.l.b16 %v364
        %v1044 = vunpack.c.l.b16 %v365
        %v1045 = vunpack.c.l.b16 %v366
        %v1046 = vunpack.c.l.b16 %v367
        %v1047 = vunpack.c.l.b16 %v368
        %v1048 = vunpack.c.l.b16 %v369
        %v1049 = vunpack.c.l.b16 %v370
        %v1050 = vunpack.c.l.b16 %v371
        %v1051 = vunpack.c.l.b16 %v372
        %v1052 = vunpack.c.l.b16 %v373
        %v1053 = vunpack.c.l.b16 %v374
        %v1054 = vunpack.c.l.b16 %v375
        %v1055 = vunpack.c.l.b16 %v376
        %v1056 = vunpack.c.l.b16 %v377
        %v1057 = vunpack.c.l.b16 %v378
        %v1058 = vunpack.c.l.b16 %v379
        %v1059 = vunpack.c.l.b16 %v380
        %v1060 = vunpack.c.l.b16 %v381
        %v1061 = vunpack.c.l.b16 %v382
        %v1062 = vunpack.c.l.b16 %v383
        %v1063 = vunpack.c.l.b16 %v384
        %v1064 = vunpack.c.l.b16 %v385
        %v1065 = vunpack.c.l.b16 %v386
        %v1066 = vunpack.c.l.b16 %v387
        %v1067 = vunpack.c.l.b16 %v388
        %v1068 = vunpack.c.l.b16 %v389
        %v1069 = vunpack.c.l.b16 %v390
        %v1070 = vunpack.c.l.b16 %v391
        %v1071 = vunpack.c.l.b16 %v392
        %v1072 = vunpack.c.l.b16 %v393
        %v1073 = vunpack.c.l.b16 %v394
        %v1074 = vunpack.c.l.b16 %v395
        %v1075 = vunpack.c.l.b16 %v396
        %v1076 = vunpack.c.l.b16 %v397
        %v1077 = vunpack.c.l.b16 %v398
        %v1078 = vunpack.c.l.b16 %v399
        %v1079 = vunpack.c.l.b16 %v400
        %v1080 = vunpack.c.l.b16 %v401
        %v1081 = vunpack.c.l.b16 %v402
        %v1082 = vunpack.c.l.b16 %v403
        %v1083 = vunpack.c.l.b16 %v404
        %v1084 = vunpack.c.l.b16 %v405
        %v1085 = vunpack.c.l.b16 %v406
        %v1086 = vunpack.c.l.b16 %v407
        %v1087 = vunpack.c.l.b16 %v408
        %v1088 = vunpack.c.l.b16 %v409
        %v1089 = vunpack.c.l.b16 %v410
        %v1090 = vunpack.c.l.b16 %v411
        %v1091 = vunpack.c.l.b16 %v412
        %v1092 = vunpack.c.l.b16 %v413
        %v1093 = vunpack.c.l.b16 %v414
        %v1094 = vunpack.c.l.b16 %v415
        %v1095 = vunpack.c.l.b16 %v416
        %v1096 = vunpack.c.l.b16 %v417
        %v1097 = vunpack.c.l.b16 %v418
        %v1098 = vunpack.c.l.b16 %v419
        %v1099 = vunpack.c.l.b16 %v420
        %v1100 = vunpack.c.l.b16 %v421
        %v1101 = vunpack.c.l.b16 %v422
        %v1102 = vunpack.c.l.b16 %v423
        %v1103 = vunpack.c.l.b16 %v424
        %v1104 = vunpack.c.l.b16 %v425
        %v1105 = vunpack.c.l.b16 %v426
        %v1106 = vunpack.c.l.b16 %v427
        %v1107 = vunpack.c.l.b16 %v428
        %v1108 = vunpack.c.l.b16 %v429
        %v1109 = vunpack.c.l.b16 %v430
        %v1110 = vunpack.c.l.b16 %v431
        %v1111 = vunpack.c.l.b16 %v432
        %v1112 = vunpack.c.l.b16 %v433
        %v1113 = vunpack.c.l.b16 %v434
        %v1114 = vunpack.c.l.b16 %v435
        %v1115 = vunpack.c.l.b16 %v436
        %v1116 = vunpack.c.l.b16 %v437
        %v1117 = vunpack.c.l.b16 %v438
        %v1118 = vunpack.c.l.b16 %v439
        %v1119 = vunpack.c.l.b16 %v440
        %v1120 = vunpack.c.l.b16 %v441
        %v1121 = vunpack.c.l.b16 %v442
        %v1122 = vunpack.c.l.b16 %v443
        %v1123 = vunpack.c.l.b16 %v444
        %v1124 = vunpack.c.l.b16 %v445
        %v1125 = vunpack.c.l.b16 %v446
        %v1126 = vunpack.c.l.b16 %v447
        %v1127 = vunpack.c.l.b16 %v448
        %v1128 = vunpack.c.l.b16 %v449
        %v1129 = vunpack.c.l.b16 %v450
        %v1130 = vunpack.c.l.b16 %v451
        %v1131 = vunpack.c.l.b16 %v452
        %v1132 = vunpack.c.l.b16 %v453
        %v1133 = vunpack.c.l.b16 %v454
        %v1134 = vunpack.c.l.b16 %v455
        %v1135 = vunpack.c.l.b16 %v456
        %v1136 = vunpack.c.l.b16 %v457
        %v1137 = vunpack.c.l.b16 %v458
        %v1138 = vunpack.c.l.b16 %v459
        %v1139 = vunpack.c.l.b16 %v460
        %v1140 = vunpack.c.l.b16 %v461
        %v1141 = vunpack.c.l.b16 %v462
        %v1142 = vunpack.c.l.b16 %v463
        %v1143 = vunpack.c.l.b16 %v464
        %v1144 = vunpack.c.l.b16 %v465
        %v1145 = vunpack.c.l.b16 %v466
        %v1146 = vunpack.c.l.b16 %v467
        %v1147 = vunpack.c.l.b16 %v468
        %v1148 = vunpack.c.l.b16 %v469
        %v1149 = vunpack.c.l.b16 %v470
        %v1150 = vunpack.c.l.b16 %v471
        %v1151 = vunpack.c.l.b16 %v472
        %v1152 = vunpack.c.l.b16 %v473
        %v1153 = vunpack.c.l.b16 %v474
        %v1154 = vunpack.c.l.b16 %v475
        %v1155 = vunpack.c.l.b16 %v476
        %v1156 = vunpack.c.l.b16 %v477
        %v1157 = vunpack.c.l.b16 %v478
        %v1158 = vunpack.c.l.b16 %v479
        %v1159 = vunpack.c.l.b16 %v480
        %v1160 = vunpack.c.l.b16 %v481
        %v1161 = vunpack.c.l.b16 %v482
        %v1162 = vunpack.c.l.b16 %v483
        %v1163 = vunpack.c.l.b16 %v484
        %v1164 = vunpack.c.l.b16 %v485
        %v1165 = vunpack.c.l.b16 %v486
        %v1166 = vunpack.c.l.b16 %v487
        %v1167 = vunpack.c.l.b16 %v488
        %v1168 = vpack.c.b16 %v913, %v912
        %v1169 = vpack.c.b16 %v915, %v914
        %v1170 = vpack.c.b16 %v917, %v916
        %v1171 = vpack.c.b16 %v919, %v918
        %v1172 = vpack.c.b16 %v921, %v920
        %v1173 = vpack.c.b16 %v923, %v922
        %v1174 = vpack.c.b16 %v925, %v924
        %v1175 = vpack.c.b16 %v927, %v926
        %v1176 = vpack.c.b16 %v929, %v928
        %v1177 = vpack.c.b16 %v931, %v930
        %v1178 = vpack.c.b16 %v933, %v932
        %v1179 = vpack.c.b16 %v935, %v934
        %v1180 = vpack.c.b16 %v937, %v936
        %v1181 = vpack.c.b16 %v939, %v938
        %v1182 = vpack.c.b16 %v941, %v940
        %v1183 = vpack.c.b16 %v943, %v942
        %v1184 = vpack.c.b16 %v945, %v944
        %v1185 = vpack.c.b16 %v947, %v946
        %v1186 = vpack.c.b16 %v949, %v948
        %v1187 = vpack.c.b16 %v951, %v950
        %v1188 = vpack.c.b16 %v953, %v952
        %v1189 = vpack.c.b16 %v955, %v954
        %v1190 = vpack.c.b16 %v957, %v956
        %v1191 = vpack.c.b16 %v959, %v958
        %v1192 = vpack.c.b16 %v961, %v960
        %v1193 = vpack.c.b16 %v963, %v962
        %v1194 = vpack.c.b16 %v965, %v964
        %v1195 = vpack.c.b16 %v967, %v966
        %v1196 = vpack.c.b16 %v969, %v968
        %v1197 = vpack.c.b16 %v971, %v970
        %v1198 = vpack.c.b16 %v973, %v972
        %v1199 = vpack.c.b16 %v975, %v974
        %v1200 = vpack.c.b16 %v977, %v976
        %v1201 = vpack.c.b16 %v979, %v978
        %v1202 = vpack.c.b16 %v981, %v980
        %v1203 = vpack.c.b16 %v983, %v982
        %v1204 = vpack.c.b16 %v985, %v984
        %v1205 = vpack.c.b16 %v987, %v986
        %v1206 = vpack.c.b16 %v989, %v988
        %v1207 = vpack.c.b16 %v991, %v990
        %v1208 = vpack.c.b16 %v993, %v992
        %v1209 = vpack.c.b16 %v995, %v994
        %v1210 = vpack.c.b16 %v997, %v996
        %v1211 = vpack.c.b16 %v999, %v998
        %v1212 = vpack.c.b16 %v1001, %v1000
        %v1213 = vpack.c.b16 %v1003, %v1002
        %v1214 = vpack.c.b16 %v1005, %v1004
        %v1215 = vpack.c.b16 %v1007, %v1006
        %v1216 = vpack.c.b16 %v1009, %v1008
        %v1217 = vpack.c.b16 %v1011, %v1010
        %v1218 = vpack.c.b16 %v1013, %v1012
        %v1219 = vpack.c.b16 %v1015, %v1014
        %v1220 = vpack.c.b16 %v1017, %v1016
        %v1221 = vpack.c.b16 %v1019, %v1018
        %v1222 = vpack.c.b16 %v1021, %v1020
        %v1223 = vpack.c.b16 %v1023, %v1022
        %v1224 = vpack.c.b16 %v1025, %v1024
        %v1225 = vpack.c.b16 %v1027, %v1026
        %v1226 = vpack.c.b16 %v1029, %v1028
        %v1227 = vpack.c.b16 %v1031, %v1030
        %v1228 = vpack.c.b16 %v1033, %v1032
        %v1229 = vpack.c.b16 %v1035, %v1034
        %v1230 = vpack.c.b16 %v1037, %v1036
        %v1231 = vpack.c.b16 %v1039, %v1038
        %v1232 = vpack.c.b16 %v1041, %v1040
        %v1233 = vpack.c.b16 %v1043, %v1042
        %v1234 = vpack.c.b16 %v1045, %v1044
        %v1235 = vpack.c.b16 %v1047, %v1046
        %v1236 = vpack.c.b16 %v1049, %v1048
        %v1237 = vpack.c.b16 %v1051, %v1050
        %v1238 = vpack.c.b16 %v1053, %v1052
        %v1239 = vpack.c.b16 %v1055, %v1054
        %v1240 = vpack.c.b16 %v1057, %v1056
        %v1241 = vpack.c.b16 %v1059, %v1058
        %v1242 = vpack.c.b16 %v1061, %v1060
        %v1243 = vpack.c.b16 %v1063, %v1062
        %v1244 = vpack.c.b16 %v1065, %v1064
        %v1245 = vpack.c.b16 %v1067, %v1066
        %v1246 = vpack.c.b16 %v1069, %v1068
        %v1247 = vpack.c.b16 %v1071, %v1070
        %v1248 = vpack.c.b16 %v1073, %v1072
        %v1249 = vpack.c.b16 %v1075, %v1074
        %v1250 = vpack.c.b16 %v1077, %v1076
        %v1251 = vpack.c.b16 %v1079, %v1078
        %v1252 = vpack.c.b16 %v1081, %v1080
        %v1253 = vpack.c.b16 %v1083, %v1082
        %v1254 = vpack.c.b16 %v1085, %v1084
        %v1255 = vpack.c.b16 %v1087, %v1086
        %v1256 = vpack.c.b16 %v1089, %v1088
        %v1257 = vpack.c.b16 %v1091, %v1090
        %v1258 = vpack.c.b16 %v1093, %v1092
        %v1259 = vpack.c.b16 %v1095, %v1094
        %v1260 = vpack.c.b16 %v1097, %v1096
        %v1261 = vpack.c.b16 %v1099, %v1098
        %v1262 = vpack.c.b16 %v1101, %v1100
        %v1263 = vpack.c.b16 %v1103, %v1102
        %v1264 = vpack.c.b16 %v1105, %v1104
        %v1265 = vpack.c.b16 %v1107, %v1106
        %v1266 = vpack.c.b16 %v1109, %v1108
        %v1267 = vpack.c.b16 %v1111, %v1110
        %v1268 = vpack.c.b16 %v1113, %v1112
        %v1269 = vpack.c.b16 %v1115, %v1114
        %v1270 = vpack.c.b16 %v1117, %v1116
        %v1271 = vpack.c.b16 %v1119, %v1118
        %v1272 = vpack.c.b16 %v1121, %v1120
        %v1273 = vpack.c.b16 %v1123, %v1122
        %v1274 = vpack.c.b16 %v1125, %v1124
        %v1275 = vpack.c.b16 %v1127, %v1126
        %v1276 = vpack.c.b16 %v1129, %v1128
        %v1277 = vpack.c.b16 %v1131, %v1130
        %v1278 = vpack.c.b16 %v1133, %v1132
        %v1279 = vpack.c.b16 %v1135, %v1134
        %v1280 = vpack.c.b16 %v1137, %v1136
        %v1281 = vpack.c.b16 %v1139, %v1138
        %v1282 = vpack.c.b16 %v1141, %v1140
        %v1283 = vpack.c.b16 %v1143, %v1142
        %v1284 = vpack.c.b16 %v1145, %v1144
        %v1285 = vpack.c.b16 %v1147, %v1146
        %v1286 = vpack.c.b16 %v1149, %v1148
        %v1287 = vpack.c.b16 %v1151, %v1150
        %v1288 = vpack.c.b16 %v1153, %v1152
        %v1289 = vpack.c.b16 %v1155, %v1154
        %v1290 = vpack.c.b16 %v1157, %v1156
        %v1291 = vpack.c.b16 %v1159, %v1158
        %v1292 = vpack.c.b16 %v1161, %v1160
        %v1293 = vpack.c.b16 %v1163, %v1162
        %v1294 = vpack.c.b16 %v1165, %v1164
        %v1295 = vpack.c.b16 %v1167, %v1166
        %1424 = vmatprep.subr.bf16.mxu0 0
        %1425 = vmatpush1.bf16.msra.mxu0 %v1175
        %1426 = vmatprep.subr.bf16.mxu0 0
        %1427 = vmatpush1.bf16.msra.mxu0 %v1174
        %1428 = vmatprep.subr.bf16.mxu0 0
        %1429 = vmatpush1.bf16.msra.mxu0 %v1173
        %1430 = vmatprep.subr.bf16.mxu0 0
        %1431 = vmatpush1.bf16.msra.mxu0 %v1172
        %1432 = vmatprep.subr.bf16.mxu0 0
        %1433 = vmatpush1.bf16.msra.mxu0 %v1171
        %1434 = vmatprep.subr.bf16.mxu0 0
        %1435 = vmatpush1.bf16.msra.mxu0 %v1170
        %1436 = vmatprep.subr.bf16.mxu0 0
        %1437 = vmatpush1.bf16.msra.mxu0 %v1169
        %1438 = vmatprep.subr.bf16.mxu0 0
        %1439 = vmatpush1.bf16.msra.mxu0 %v1168
        %1440 = vmatprep.subr.bf16.mxu0 0
        %1441 = vmatpush2.bf16.msra.mxu0 %v1183
        %1442 = vmatprep.subr.bf16.mxu0 0
        %1443 = vmatpush2.bf16.msra.mxu0 %v1182
        %1444 = vmatprep.subr.bf16.mxu0 0
        %1445 = vmatpush2.bf16.msra.mxu0 %v1181
        %1446 = vmatprep.subr.bf16.mxu0 0
        %1447 = vmatpush2.bf16.msra.mxu0 %v1180
        %1448 = vmatprep.subr.bf16.mxu0 0
        %1449 = vmatpush2.bf16.msra.mxu0 %v1179
        %1450 = vmatprep.subr.bf16.mxu0 0
        %1451 = vmatpush2.bf16.msra.mxu0 %v1178
        %1452 = vmatprep.subr.bf16.mxu0 0
        %1453 = vmatpush2.bf16.msra.mxu0 %v1177
        %1454 = vmatprep.subr.bf16.mxu0 0
        %1455 = vmatpush2.bf16.msra.mxu0 %v1176
        %1456 = vmatprep.mubr.bf16.mxu0 %v593
        %1457 = vmatmul.mubr.bf16.gmra.mxu0 %v592
        %v1458 = vpop.f32.mrf.mxu0
        %v1459 = vadd.f32 %v494, %v1458
        %v1460 = vpop.f32.mrf.mxu0
        %v1461 = vpop.f32.mrf.mxu0
        %v1462 = vadd.f32 %v494, %v1461
        %v1463 = vpop.f32.mrf.mxu0
        %1464 = vmatprep.mubr.bf16.mxu0 %v609
        %1465 = vmatmul.mubr.bf16.gmra.mxu0 %v608
        %v1466 = vpop.f32.mrf.mxu0
        %v1467 = vadd.f32 %v494, %v1466
        %v1468 = vpop.f32.mrf.mxu0
        %v1469 = vpop.f32.mrf.mxu0
        %v1470 = vadd.f32 %v494, %v1469
        %v1471 = vpop.f32.mrf.mxu0
        %1472 = vdwg.mxu0
        %1473 = vmatprep.subr.bf16.mxu0 0
        %1474 = vmatpush1.bf16.msra.mxu0 %v1191
        %1475 = vmatprep.subr.bf16.mxu0 0
        %1476 = vmatpush1.bf16.msra.mxu0 %v1190
        %1477 = vmatprep.subr.bf16.mxu0 0
        %1478 = vmatpush1.bf16.msra.mxu0 %v1189
        %1479 = vmatprep.subr.bf16.mxu0 0
        %1480 = vmatpush1.bf16.msra.mxu0 %v1188
        %1481 = vmatprep.subr.bf16.mxu0 0
        %1482 = vmatpush1.bf16.msra.mxu0 %v1187
        %1483 = vmatprep.subr.bf16.mxu0 0
        %1484 = vmatpush1.bf16.msra.mxu0 %v1186
        %1485 = vmatprep.subr.bf16.mxu0 0
        %1486 = vmatpush1.bf16.msra.mxu0 %v1185
        %1487 = vmatprep.subr.bf16.mxu0 0
        %1488 = vmatpush1.bf16.msra.mxu0 %v1184
        %1489 = vmatprep.subr.bf16.mxu0 0
        %1490 = vmatpush2.bf16.msra.mxu0 %v1199
        %1491 = vmatprep.subr.bf16.mxu0 0
        %1492 = vmatpush2.bf16.msra.mxu0 %v1198
        %1493 = vmatprep.subr.bf16.mxu0 0
        %1494 = vmatpush2.bf16.msra.mxu0 %v1197
        %1495 = vmatprep.subr.bf16.mxu0 0
        %1496 = vmatpush2.bf16.msra.mxu0 %v1196
        %1497 = vmatprep.subr.bf16.mxu0 0
        %1498 = vmatpush2.bf16.msra.mxu0 %v1195
        %1499 = vmatprep.subr.bf16.mxu0 0
        %1500 = vmatpush2.bf16.msra.mxu0 %v1194
        %1501 = vmatprep.subr.bf16.mxu0 0
        %1502 = vmatpush2.bf16.msra.mxu0 %v1193
        %1503 = vmatprep.subr.bf16.mxu0 0
        %1504 = vmatpush2.bf16.msra.mxu0 %v1192
        %1505 = vmatprep.mubr.bf16.mxu0 %v595
        %1506 = vmatmul.mubr.bf16.gmra.mxu0 %v594
        %v1507 = vpop.f32.mrf.mxu0
        %v1508 = vadd.f32 %v1459, %v1507
        %v1509 = vpop.f32.mrf.mxu0
        %v1510 = vpop.f32.mrf.mxu0
        %v1511 = vadd.f32 %v1462, %v1510
        %v1512 = vpop.f32.mrf.mxu0
        %1513 = vmatprep.mubr.bf16.mxu0 %v611
        %1514 = vmatmul.mubr.bf16.gmra.mxu0 %v610
        %v1515 = vpop.f32.mrf.mxu0
        %v1516 = vadd.f32 %v1467, %v1515
        %v1517 = vpop.f32.mrf.mxu0
        %v1518 = vpop.f32.mrf.mxu0
        %v1519 = vadd.f32 %v1470, %v1518
        %v1520 = vpop.f32.mrf.mxu0
        %1521 = vdwg.mxu0
        %1522 = vmatprep.subr.bf16.mxu0 0
        %1523 = vmatpush1.bf16.msra.mxu0 %v1207
        %1524 = vmatprep.subr.bf16.mxu0 0
        %1525 = vmatpush1.bf16.msra.mxu0 %v1206
        %1526 = vmatprep.subr.bf16.mxu0 0
        %1527 = vmatpush1.bf16.msra.mxu0 %v1205
        %1528 = vmatprep.subr.bf16.mxu0 0
        %1529 = vmatpush1.bf16.msra.mxu0 %v1204
        %1530 = vmatprep.subr.bf16.mxu0 0
        %1531 = vmatpush1.bf16.msra.mxu0 %v1203
        %1532 = vmatprep.subr.bf16.mxu0 0
        %1533 = vmatpush1.bf16.msra.mxu0 %v1202
        %1534 = vmatprep.subr.bf16.mxu0 0
        %1535 = vmatpush1.bf16.msra.mxu0 %v1201
        %1536 = vmatprep.subr.bf16.mxu0 0
        %1537 = vmatpush1.bf16.msra.mxu0 %v1200
        %1538 = vmatprep.subr.bf16.mxu0 0
        %1539 = vmatpush2.bf16.msra.mxu0 %v1215
        %1540 = vmatprep.subr.bf16.mxu0 0
        %1541 = vmatpush2.bf16.msra.mxu0 %v1214
        %1542 = vmatprep.subr.bf16.mxu0 0
        %1543 = vmatpush2.bf16.msra.mxu0 %v1213
        %1544 = vmatprep.subr.bf16.mxu0 0
        %1545 = vmatpush2.bf16.msra.mxu0 %v1212
        %1546 = vmatprep.subr.bf16.mxu0 0
        %1547 = vmatpush2.bf16.msra.mxu0 %v1211
        %1548 = vmatprep.subr.bf16.mxu0 0
        %1549 = vmatpush2.bf16.msra.mxu0 %v1210
        %1550 = vmatprep.subr.bf16.mxu0 0
        %1551 = vmatpush2.bf16.msra.mxu0 %v1209
        %1552 = vmatprep.subr.bf16.mxu0 0
        %1553 = vmatpush2.bf16.msra.mxu0 %v1208
        %1554 = vmatprep.mubr.bf16.mxu0 %v597
        %1555 = vmatmul.mubr.bf16.gmra.mxu0 %v596
        %v1556 = vpop.f32.mrf.mxu0
        %v1557 = vadd.f32 %v1508, %v1556
        %v1558 = vpop.f32.mrf.mxu0
        %v1559 = vpop.f32.mrf.mxu0
        %v1560 = vadd.f32 %v1511, %v1559
        %v1561 = vpop.f32.mrf.mxu0
        %1562 = vmatprep.mubr.bf16.mxu0 %v613
        %1563 = vmatmul.mubr.bf16.gmra.mxu0 %v612
        %v1564 = vpop.f32.mrf.mxu0
        %v1565 = vadd.f32 %v1516, %v1564
        %v1566 = vpop.f32.mrf.mxu0
        %v1567 = vpop.f32.mrf.mxu0
        %v1568 = vadd.f32 %v1519, %v1567
        %v1569 = vpop.f32.mrf.mxu0
        %1570 = vdwg.mxu0
        %1571 = vmatprep.subr.bf16.mxu0 0
        %1572 = vmatpush1.bf16.msra.mxu0 %v1223
        %1573 = vmatprep.subr.bf16.mxu0 0
        %1574 = vmatpush1.bf16.msra.mxu0 %v1222
        %1575 = vmatprep.subr.bf16.mxu0 0
        %1576 = vmatpush1.bf16.msra.mxu0 %v1221
        %1577 = vmatprep.subr.bf16.mxu0 0
        %1578 = vmatpush1.bf16.msra.mxu0 %v1220
        %1579 = vmatprep.subr.bf16.mxu0 0
        %1580 = vmatpush1.bf16.msra.mxu0 %v1219
        %1581 = vmatprep.subr.bf16.mxu0 0
        %1582 = vmatpush1.bf16.msra.mxu0 %v1218
        %1583 = vmatprep.subr.bf16.mxu0 0
        %1584 = vmatpush1.bf16.msra.mxu0 %v1217
        %1585 = vmatprep.subr.bf16.mxu0 0
        %1586 = vmatpush1.bf16.msra.mxu0 %v1216
        %1587 = vmatprep.subr.bf16.mxu0 0
        %1588 = vmatpush2.bf16.msra.mxu0 %v1231
        %1589 = vmatprep.subr.bf16.mxu0 0
        %1590 = vmatpush2.bf16.msra.mxu0 %v1230
        %1591 = vmatprep.subr.bf16.mxu0 0
        %1592 = vmatpush2.bf16.msra.mxu0 %v1229
        %1593 = vmatprep.subr.bf16.mxu0 0
        %1594 = vmatpush2.bf16.msra.mxu0 %v1228
        %1595 = vmatprep.subr.bf16.mxu0 0
        %1596 = vmatpush2.bf16.msra.mxu0 %v1227
        %1597 = vmatprep.subr.bf16.mxu0 0
        %1598 = vmatpush2.bf16.msra.mxu0 %v1226
        %1599 = vmatprep.subr.bf16.mxu0 0
        %1600 = vmatpush2.bf16.msra.mxu0 %v1225
        %1601 = vmatprep.subr.bf16.mxu0 0
        %1602 = vmatpush2.bf16.msra.mxu0 %v1224
        %1603 = vmatprep.mubr.bf16.mxu0 %v599
        %1604 = vmatmul.mubr.bf16.gmra.mxu0 %v598
        %v1605 = vpop.f32.mrf.mxu0
        %v1606 = vadd.f32 %v1557, %v1605
        %v1607 = vpop.f32.mrf.mxu0
        %v1608 = vpop.f32.mrf.mxu0
        %v1609 = vadd.f32 %v1560, %v1608
        %v1610 = vpop.f32.mrf.mxu0
        %1611 = vmatprep.mubr.bf16.mxu0 %v615
        %1612 = vmatmul.mubr.bf16.gmra.mxu0 %v614
        %v1613 = vpop.f32.mrf.mxu0
        %v1614 = vadd.f32 %v1565, %v1613
        %v1615 = vpop.f32.mrf.mxu0
        %v1616 = vpop.f32.mrf.mxu0
        %v1617 = vadd.f32 %v1568, %v1616
        %v1618 = vpop.f32.mrf.mxu0
        %1619 = vdwg.mxu0
        %1620 = vmatprep.subr.bf16.mxu0 0
        %1621 = vmatpush1.bf16.msra.mxu0 %v1239
        %1622 = vmatprep.subr.bf16.mxu0 0
        %1623 = vmatpush1.bf16.msra.mxu0 %v1238
        %1624 = vmatprep.subr.bf16.mxu0 0
        %1625 = vmatpush1.bf16.msra.mxu0 %v1237
        %1626 = vmatprep.subr.bf16.mxu0 0
        %1627 = vmatpush1.bf16.msra.mxu0 %v1236
        %1628 = vmatprep.subr.bf16.mxu0 0
        %1629 = vmatpush1.bf16.msra.mxu0 %v1235
        %1630 = vmatprep.subr.bf16.mxu0 0
        %1631 = vmatpush1.bf16.msra.mxu0 %v1234
        %1632 = vmatprep.subr.bf16.mxu0 0
        %1633 = vmatpush1.bf16.msra.mxu0 %v1233
        %1634 = vmatprep.subr.bf16.mxu0 0
        %1635 = vmatpush1.bf16.msra.mxu0 %v1232
        %1636 = vmatprep.subr.bf16.mxu0 0
        %1637 = vmatpush2.bf16.msra.mxu0 %v1247
        %1638 = vmatprep.subr.bf16.mxu0 0
        %1639 = vmatpush2.bf16.msra.mxu0 %v1246
        %1640 = vmatprep.subr.bf16.mxu0 0
        %1641 = vmatpush2.bf16.msra.mxu0 %v1245
        %1642 = vmatprep.subr.bf16.mxu0 0
        %1643 = vmatpush2.bf16.msra.mxu0 %v1244
        %1644 = vmatprep.subr.bf16.mxu0 0
        %1645 = vmatpush2.bf16.msra.mxu0 %v1243
        %1646 = vmatprep.subr.bf16.mxu0 0
        %1647 = vmatpush2.bf16.msra.mxu0 %v1242
        %1648 = vmatprep.subr.bf16.mxu0 0
        %1649 = vmatpush2.bf16.msra.mxu0 %v1241
        %1650 = vmatprep.subr.bf16.mxu0 0
        %1651 = vmatpush2.bf16.msra.mxu0 %v1240
        %1652 = vmatprep.mubr.bf16.mxu0 %v601
        %1653 = vmatmul.mubr.bf16.gmra.mxu0 %v600
        %v1654 = vpop.f32.mrf.mxu0
        %v1655 = vadd.f32 %v1606, %v1654
        %v1656 = vpop.f32.mrf.mxu0
        %v1657 = vpop.f32.mrf.mxu0
        %v1658 = vadd.f32 %v1609, %v1657
        %v1659 = vpop.f32.mrf.mxu0
        %1660 = vmatprep.mubr.bf16.mxu0 %v617
        %1661 = vmatmul.mubr.bf16.gmra.mxu0 %v616
        %v1662 = vpop.f32.mrf.mxu0
        %v1663 = vadd.f32 %v1614, %v1662
        %v1664 = vpop.f32.mrf.mxu0
        %v1665 = vpop.f32.mrf.mxu0
        %v1666 = vadd.f32 %v1617, %v1665
        %v1667 = vpop.f32.mrf.mxu0
        %1668 = vdwg.mxu0
        %1669 = vmatprep.subr.bf16.mxu0 0
        %1670 = vmatpush1.bf16.msra.mxu0 %v1255
        %1671 = vmatprep.subr.bf16.mxu0 0
        %1672 = vmatpush1.bf16.msra.mxu0 %v1254
        %1673 = vmatprep.subr.bf16.mxu0 0
        %1674 = vmatpush1.bf16.msra.mxu0 %v1253
        %1675 = vmatprep.subr.bf16.mxu0 0
        %1676 = vmatpush1.bf16.msra.mxu0 %v1252
        %1677 = vmatprep.subr.bf16.mxu0 0
        %1678 = vmatpush1.bf16.msra.mxu0 %v1251
        %1679 = vmatprep.subr.bf16.mxu0 0
        %1680 = vmatpush1.bf16.msra.mxu0 %v1250
        %1681 = vmatprep.subr.bf16.mxu0 0
        %1682 = vmatpush1.bf16.msra.mxu0 %v1249
        %1683 = vmatprep.subr.bf16.mxu0 0
        %1684 = vmatpush1.bf16.msra.mxu0 %v1248
        %1685 = vmatprep.subr.bf16.mxu0 0
        %1686 = vmatpush2.bf16.msra.mxu0 %v1263
        %1687 = vmatprep.subr.bf16.mxu0 0
        %1688 = vmatpush2.bf16.msra.mxu0 %v1262
        %1689 = vmatprep.subr.bf16.mxu0 0
        %1690 = vmatpush2.bf16.msra.mxu0 %v1261
        %1691 = vmatprep.subr.bf16.mxu0 0
        %1692 = vmatpush2.bf16.msra.mxu0 %v1260
        %1693 = vmatprep.subr.bf16.mxu0 0
        %1694 = vmatpush2.bf16.msra.mxu0 %v1259
        %1695 = vmatprep.subr.bf16.mxu0 0
        %1696 = vmatpush2.bf16.msra.mxu0 %v1258
        %1697 = vmatprep.subr.bf16.mxu0 0
        %1698 = vmatpush2.bf16.msra.mxu0 %v1257
        %1699 = vmatprep.subr.bf16.mxu0 0
        %1700 = vmatpush2.bf16.msra.mxu0 %v1256
        %1701 = vmatprep.mubr.bf16.mxu0 %v603
        %1702 = vmatmul.mubr.bf16.gmra.mxu0 %v602
        %v1703 = vpop.f32.mrf.mxu0
        %v1704 = vadd.f32 %v1655, %v1703
        %v1705 = vpop.f32.mrf.mxu0
        %v1706 = vpop.f32.mrf.mxu0
        %v1707 = vadd.f32 %v1658, %v1706
        %v1708 = vpop.f32.mrf.mxu0
        %1709 = vmatprep.mubr.bf16.mxu0 %v619
        %1710 = vmatmul.mubr.bf16.gmra.mxu0 %v618
        %v1711 = vpop.f32.mrf.mxu0
        %v1712 = vadd.f32 %v1663, %v1711
        %v1713 = vpop.f32.mrf.mxu0
        %v1714 = vpop.f32.mrf.mxu0
        %v1715 = vadd.f32 %v1666, %v1714
        %v1716 = vpop.f32.mrf.mxu0
        %1717 = vdwg.mxu0
        %1718 = vmatprep.subr.bf16.mxu0 0
        %1719 = vmatpush1.bf16.msra.mxu0 %v1271
        %1720 = vmatprep.subr.bf16.mxu0 0
        %1721 = vmatpush1.bf16.msra.mxu0 %v1270
        %1722 = vmatprep.subr.bf16.mxu0 0
        %1723 = vmatpush1.bf16.msra.mxu0 %v1269
        %1724 = vmatprep.subr.bf16.mxu0 0
        %1725 = vmatpush1.bf16.msra.mxu0 %v1268
        %1726 = vmatprep.subr.bf16.mxu0 0
        %1727 = vmatpush1.bf16.msra.mxu0 %v1267
        %1728 = vmatprep.subr.bf16.mxu0 0
        %1729 = vmatpush1.bf16.msra.mxu0 %v1266
        %1730 = vmatprep.subr.bf16.mxu0 0
        %1731 = vmatpush1.bf16.msra.mxu0 %v1265
        %1732 = vmatprep.subr.bf16.mxu0 0
        %1733 = vmatpush1.bf16.msra.mxu0 %v1264
        %1734 = vmatprep.subr.bf16.mxu0 0
        %1735 = vmatpush2.bf16.msra.mxu0 %v1279
        %1736 = vmatprep.subr.bf16.mxu0 0
        %1737 = vmatpush2.bf16.msra.mxu0 %v1278
        %1738 = vmatprep.subr.bf16.mxu0 0
        %1739 = vmatpush2.bf16.msra.mxu0 %v1277
        %1740 = vmatprep.subr.bf16.mxu0 0
        %1741 = vmatpush2.bf16.msra.mxu0 %v1276
        %1742 = vmatprep.subr.bf16.mxu0 0
        %1743 = vmatpush2.bf16.msra.mxu0 %v1275
        %1744 = vmatprep.subr.bf16.mxu0 0
        %1745 = vmatpush2.bf16.msra.mxu0 %v1274
        %1746 = vmatprep.subr.bf16.mxu0 0
        %1747 = vmatpush2.bf16.msra.mxu0 %v1273
        %1748 = vmatprep.subr.bf16.mxu0 0
        %1749 = vmatpush2.bf16.msra.mxu0 %v1272
        %1750 = vmatprep.mubr.bf16.mxu0 %v605
        %1751 = vmatmul.mubr.bf16.gmra.mxu0 %v604
        %v1752 = vpop.f32.mrf.mxu0
        %v1753 = vadd.f32 %v1704, %v1752
        %v1754 = vpop.f32.mrf.mxu0
        %v1755 = vpop.f32.mrf.mxu0
        %v1756 = vadd.f32 %v1707, %v1755
        %v1757 = vpop.f32.mrf.mxu0
        %1758 = vmatprep.mubr.bf16.mxu0 %v621
        %1759 = vmatmul.mubr.bf16.gmra.mxu0 %v620
        %v1760 = vpop.f32.mrf.mxu0
        %v1761 = vadd.f32 %v1712, %v1760
        %v1762 = vpop.f32.mrf.mxu0
        %v1763 = vpop.f32.mrf.mxu0
        %v1764 = vadd.f32 %v1715, %v1763
        %v1765 = vpop.f32.mrf.mxu0
        %1766 = vdwg.mxu0
        %1767 = vmatprep.subr.bf16.mxu0 0
        %1768 = vmatpush1.bf16.msra.mxu0 %v1287
        %1769 = vmatprep.subr.bf16.mxu0 0
        %1770 = vmatpush1.bf16.msra.mxu0 %v1286
        %1771 = vmatprep.subr.bf16.mxu0 0
        %1772 = vmatpush1.bf16.msra.mxu0 %v1285
        %1773 = vmatprep.subr.bf16.mxu0 0
        %1774 = vmatpush1.bf16.msra.mxu0 %v1284
        %1775 = vmatprep.subr.bf16.mxu0 0
        %1776 = vmatpush1.bf16.msra.mxu0 %v1283
        %1777 = vmatprep.subr.bf16.mxu0 0
        %1778 = vmatpush1.bf16.msra.mxu0 %v1282
        %1779 = vmatprep.subr.bf16.mxu0 0
        %1780 = vmatpush1.bf16.msra.mxu0 %v1281
        %1781 = vmatprep.subr.bf16.mxu0 0
        %1782 = vmatpush1.bf16.msra.mxu0 %v1280
        %1783 = vmatprep.subr.bf16.mxu0 0
        %1784 = vmatpush2.bf16.msra.mxu0 %v1295
        %1785 = vmatprep.subr.bf16.mxu0 0
        %1786 = vmatpush2.bf16.msra.mxu0 %v1294
        %1787 = vmatprep.subr.bf16.mxu0 0
        %1788 = vmatpush2.bf16.msra.mxu0 %v1293
        %1789 = vmatprep.subr.bf16.mxu0 0
        %1790 = vmatpush2.bf16.msra.mxu0 %v1292
        %1791 = vmatprep.subr.bf16.mxu0 0
        %1792 = vmatpush2.bf16.msra.mxu0 %v1291
        %1793 = vmatprep.subr.bf16.mxu0 0
        %1794 = vmatpush2.bf16.msra.mxu0 %v1290
        %1795 = vmatprep.subr.bf16.mxu0 0
        %1796 = vmatpush2.bf16.msra.mxu0 %v1289
        %1797 = vmatprep.subr.bf16.mxu0 0
        %1798 = vmatpush2.bf16.msra.mxu0 %v1288
        %1799 = vmatprep.mubr.bf16.mxu0 %v607
        %1800 = vmatmul.mubr.bf16.gmra.mxu0 %v606
        %v1801 = vpop.f32.mrf.mxu0
        %v1802 = vadd.f32 %v1753, %v1801
        %v1803 = vpop.f32.mrf.mxu0
        %v1804 = vpop.f32.mrf.mxu0
        %v1805 = vadd.f32 %v1756, %v1804
        %v1806 = vpop.f32.mrf.mxu0
        %1807 = vmatprep.mubr.bf16.mxu0 %v623
        %1808 = vmatmul.mubr.bf16.gmra.mxu0 %v622
        %v1809 = vpop.f32.mrf.mxu0
        %v1810 = vadd.f32 %v1761, %v1809
        %v1811 = vpop.f32.mrf.mxu0
        %v1812 = vpop.f32.mrf.mxu0
        %v1813 = vadd.f32 %v1764, %v1812
        %v1814 = vpop.f32.mrf.mxu0
        %1815 = vdwg.mxu0
        %1816 = vst [vmem:[%s177] sm:$0xff] %v1802
        %1817 = vst [vmem:[%s177 + $0x8] sm:$0xff] %v1805
        %1818 = vst [vmem:[%s177 + $0x10] sm:$0xff] %v1810
        %1819 = vst [vmem:[%s177 + $0x18] sm:$0xff] %v1813
        %s1820 = sand.u32 %s90, 1
        %s1821 = sand.u32 %s90, 1
        %s1822 = smul.addr %s1821, 32
        %s1823 = scalar_lea.vmem [#allocation2], %s1822
        // Predicated region
        $region33: #{classifier_forward.1} parent=31 // pred_check
          %p1824 = pneg %p100
        $region34: #{classifier_forward.1} parent=31 // pred_check_branch
          %1826 = sbr.rel (%p1824) target = $region36
        $region35: #{classifier_forward.1} parent=31 // pred_region
          %s1827 = smul.u32 4, %s14
          %s1828 = ssub.s32 6, %s1827
          %p1829 = scmp.lt.s32.totalorder %s1828, 4
          %s1830 = scalar_select %p1829, %s1828, 4
          %s1831 = smul.u32 128, %s1830
          %p1832 = scmp.ne.s32.totalorder 0, %s1831
          %s1833 = smul.addr %s1827, 8
          %s1834 = scalar_lea.vmem %s3, %s1833
          // Predicated region
          $region37: #{classifier_forward.1} parent=35 // pred_check
            %p1835 = pneg %p1832
          $region38: #{classifier_forward.1} parent=35 // pred_check_branch
            %1837 = sbr.rel (%p1835) target = $region40
          $region39: #{classifier_forward.1} parent=35 // pred_region
            // Predicated region
            $region41: #{classifier_forward.1} parent=39 // pred_check
              _
            $region42: #{classifier_forward.1} parent=39 // pred_check_branch
              %1839 = sbr.rel (0) target = $region44
            $region43: #{classifier_forward.1} parent=39 // pred_region
              // Predicated region
              $region63: #{classifier_forward.1} parent=43 // pred_check
                _
              $region64: #{classifier_forward.1} parent=43 // pred_check_branch
                %1895 = sbr.rel (0) target = $region66
              $region65: #{classifier_forward.1} parent=43 // pred_region
                %s1896 = sshrl.u32 %s1830, 2
                // While loop
                $region67: #{classifier_forward.1} parent=65 // loop_pre_header
                  _
                $region68: #{classifier_forward.1} parent=65 // loop_header
                  %s1898 = sphi 0, %s1900
                  %p1899 = scmp.ge.s32.totalorder %s1898, %s1896
                  %s1903 = sphi 0, %s1916
                  %s1904 = sphi %s1823, %s1919
                  %s1905 = sphi %s1834, %s1920
                $region69: #{classifier_forward.1} parent=65 // loop_header_branch
                  %1902 = sbr.rel (%p1899) target = $region73
                $region70: #{classifier_forward.1} parent=65 // loop_body
                  %v1906 = vld [vmem:[%s1904] sm:$0xff]
                  %1907 = vst [vmem:[%s1905] sm:$0xff] %v1906
                  %v1908 = vld [vmem:[%s1904 + $0x8] sm:$0xff]
                  %1909 = vst [vmem:[%s1905 + $0x8] sm:$0xff] %v1908
                  %v1910 = vld [vmem:[%s1904 + $0x10] sm:$0xff]
                  %1911 = vst [vmem:[%s1905 + $0x10] sm:$0xff] %v1910
                  %v1912 = vld [vmem:[%s1904 + $0x18] sm:$0xff]
                  %1913 = vst [vmem:[%s1905 + $0x18] sm:$0xff] %v1912
                  %s1914 = sadd.s32 1, %s1903
                  %p1915 = scmp.ge.s32.totalorder %s1914, %s1896
                  %s1916 = scalar_select %p1915, 0, %s1914
                  %s1917 = smul.u32 %s1916, 32
                  %s1918 = smul.u32 %s1916, 32
                  %s1919 = scalar_lea.vmem %s1823, %s1917 [#allocation2]
                  %s1920 = scalar_lea.vmem %s1834, %s1918
                $region71: #{classifier_forward.1} parent=65 // loop_footer
                  %s1900 = sadd.s32 %s1898, 1
                $region72: #{classifier_forward.1} parent=65 // loop_footer_branch
                  %1897 = sbr.rel target = $region68
                $region73: #{classifier_forward.1} parent=65 // loop_exit
                  _
                %s1921 = sshrl.u32 %s1830, 2
                %s1922 = sand.u32 %s1830, 3
                %s1923 = smul.u32 %s1921, 4
                %s1924 = smul.u32 8, %s1923
                %s1925 = scalar_lea.vmem %s1823, %s1924 [#allocation2]
                %s1926 = smul.u32 8, %s1923
                %s1927 = scalar_lea.vmem %s1834, %s1926
                // While loop
                $region74: #{classifier_forward.1} parent=65 // loop_pre_header
                  _
                $region75: #{classifier_forward.1} parent=65 // loop_header
                  %s1929 = sphi 0, %s1931
                  %p1930 = scmp.ge.s32.totalorder %s1929, %s1922
                  %s1934 = sphi 0, %s1941
                  %s1935 = sphi %s1925, %s1944
                  %s1936 = sphi %s1927, %s1945
                $region76: #{classifier_forward.1} parent=65 // loop_header_branch
                  %1933 = sbr.rel (%p1930) target = $region80
                $region77: #{classifier_forward.1} parent=65 // loop_body
                  %v1937 = vld [vmem:[%s1935] sm:$0xff]
                  %1938 = vst [vmem:[%s1936] sm:$0xff] %v1937
                  %s1939 = sadd.s32 1, %s1934
                  %p1940 = scmp.ge.s32.totalorder %s1939, %s1922
                  %s1941 = scalar_select %p1940, 0, %s1939
                  %s1942 = smul.u32 %s1941, 8
                  %s1943 = smul.u32 %s1941, 8
                  %s1944 = scalar_lea.vmem %s1925, %s1942 [#allocation2]
                  %s1945 = scalar_lea.vmem %s1927, %s1943
                $region78: #{classifier_forward.1} parent=65 // loop_footer
                  %s1931 = sadd.s32 %s1929, 1
                $region79: #{classifier_forward.1} parent=65 // loop_footer_branch
                  %1928 = sbr.rel target = $region75
                $region80: #{classifier_forward.1} parent=65 // loop_exit
                  _
              $region66: #{classifier_forward.1} parent=43 // pred_fallthru
                _
              // Predicated region
              $region81: #{classifier_forward.1} parent=43 // pred_check
                _
              $region82: #{classifier_forward.1} parent=43 // pred_check_branch
                %1947 = sbr.rel target = $region84
              $region83: #{classifier_forward.1} parent=43 // pred_region
                _
              $region84: #{classifier_forward.1} parent=43 // pred_fallthru
                _
            $region44: #{classifier_forward.1} parent=39 // pred_fallthru
              _
            // Predicated region
            $region45: #{classifier_forward.1} parent=39 // pred_check
              _
            $region46: #{classifier_forward.1} parent=39 // pred_check_branch
              %1841 = sbr.rel target = $region48
            $region47: #{classifier_forward.1} parent=39 // pred_region
              %s1843 = ssub.s32 256, 1
              %s1844 = sshrl.u32 %s1830, 2
              // While loop
              $region49: #{classifier_forward.1} parent=47 // loop_pre_header
                _
              $region50: #{classifier_forward.1} parent=47 // loop_header
                %s1846 = sphi 0, %s1848
                %p1847 = scmp.ge.s32.totalorder %s1846, %s1844
                %s1851 = sphi 0, %s1864
                %s1852 = sphi %s1823, %s1867
                %s1853 = sphi %s1834, %s1868
              $region51: #{classifier_forward.1} parent=47 // loop_header_branch
                %1850 = sbr.rel (%p1847) target = $region55
              $region52: #{classifier_forward.1} parent=47 // loop_body
                %v1854 = vld [vmem:[%s1852] sm:%s1843]
                %1855 = vst [vmem:[%s1853] sm:%s1843] %v1854
                %v1856 = vld [vmem:[%s1852 + $0x8] sm:%s1843]
                %1857 = vst [vmem:[%s1853 + $0x8] sm:%s1843] %v1856
                %v1858 = vld [vmem:[%s1852 + $0x10] sm:%s1843]
                %1859 = vst [vmem:[%s1853 + $0x10] sm:%s1843] %v1858
                %v1860 = vld [vmem:[%s1852 + $0x18] sm:%s1843]
                %1861 = vst [vmem:[%s1853 + $0x18] sm:%s1843] %v1860
                %s1862 = sadd.s32 1, %s1851
                %p1863 = scmp.ge.s32.totalorder %s1862, %s1844
                %s1864 = scalar_select %p1863, 0, %s1862
                %s1865 = smul.u32 %s1864, 32
                %s1866 = smul.u32 %s1864, 32
                %s1867 = scalar_lea.vmem %s1823, %s1865 [#allocation2]
                %s1868 = scalar_lea.vmem %s1834, %s1866
              $region53: #{classifier_forward.1} parent=47 // loop_footer
                %s1848 = sadd.s32 %s1846, 1
              $region54: #{classifier_forward.1} parent=47 // loop_footer_branch
                %1845 = sbr.rel target = $region50
              $region55: #{classifier_forward.1} parent=47 // loop_exit
                _
              %s1869 = sshrl.u32 %s1830, 2
              %s1870 = sand.u32 %s1830, 3
              %s1871 = smul.u32 %s1869, 4
              %s1872 = smul.u32 8, %s1871
              %s1873 = scalar_lea.vmem %s1823, %s1872 [#allocation2]
              %s1874 = smul.u32 8, %s1871
              %s1875 = scalar_lea.vmem %s1834, %s1874
              // While loop
              $region56: #{classifier_forward.1} parent=47 // loop_pre_header
                _
              $region57: #{classifier_forward.1} parent=47 // loop_header
                %s1877 = sphi 0, %s1879
                %p1878 = scmp.ge.s32.totalorder %s1877, %s1870
                %s1882 = sphi 0, %s1889
                %s1883 = sphi %s1873, %s1892
                %s1884 = sphi %s1875, %s1893
              $region58: #{classifier_forward.1} parent=47 // loop_header_branch
                %1881 = sbr.rel (%p1878) target = $region62
              $region59: #{classifier_forward.1} parent=47 // loop_body
                %v1885 = vld [vmem:[%s1883] sm:%s1843]
                %1886 = vst [vmem:[%s1884] sm:%s1843] %v1885
                %s1887 = sadd.s32 1, %s1882
                %p1888 = scmp.ge.s32.totalorder %s1887, %s1870
                %s1889 = scalar_select %p1888, 0, %s1887
                %s1890 = smul.u32 %s1889, 8
                %s1891 = smul.u32 %s1889, 8
                %s1892 = scalar_lea.vmem %s1873, %s1890 [#allocation2]
                %s1893 = scalar_lea.vmem %s1875, %s1891
              $region60: #{classifier_forward.1} parent=47 // loop_footer
                %s1879 = sadd.s32 %s1877, 1
              $region61: #{classifier_forward.1} parent=47 // loop_footer_branch
                %1876 = sbr.rel target = $region57
              $region62: #{classifier_forward.1} parent=47 // loop_exit
                _
            $region48: #{classifier_forward.1} parent=39 // pred_fallthru
              _
          $region40: #{classifier_forward.1} parent=35 // pred_fallthru
            _
          %1948 = vnop
        $region36: #{classifier_forward.1} parent=31 // pred_fallthru
          _
      $region32: #{classifier_forward.1} parent=5 // pred_fallthru
        _
      %p1949 = scmp.le.s32.totalorder 2, %s9
      // Predicated region
      $region85: #{classifier_forward.1} parent=5 // pred_check
        %p1950 = pneg %p1949
      $region86: #{classifier_forward.1} parent=5 // pred_check_branch
        %1952 = sbr.rel (%p1950) target = $region88
      $region87: #{classifier_forward.1} parent=5 // pred_region
        %s1953 = ssub.s32 %s9, 2
        // Predicated region
        $region89: #{classifier_forward.1} parent=87 // pred_check
          %p1954 = pneg %p106
        $region90: #{classifier_forward.1} parent=87 // pred_check_branch
          %1956 = sbr.rel (%p1954) target = $region92
        $region91: #{classifier_forward.1} parent=87 // pred_region
          %s1957 = sand.u32 %s91, 1
          %s1958 = sand.u32 %s91, 1
          %s1959 = smul.addr %s1958, 32
          %s1960 = scalar_lea.vmem [#allocation2], %s1959
        $region92: #{classifier_forward.1} parent=87 // pred_fallthru
          _
      $region88: #{classifier_forward.1} parent=5 // pred_fallthru
        _
    $region6: #{classifier_forward.1} parent=1 // loop_footer
      %s13 = sadd.s32 1, %s9
    $region7: #{classifier_forward.1} parent=1 // loop_footer_branch
      %8 = sbr.rel target = $region3
    $region8: #{classifier_forward.1} parent=1 // loop_exit
      _

</llo_original>
